<compile_context>
chip_gen: v7x
topology: tpu7x:2x2x1
jax: 0.10.0
libtpu: 0.0.40
codegen_flags: <defaults>
</compile_context>

<pallas_src>
import functools
import numpy as np

import jax
import jax.numpy as jnp
from jax import lax
from jax.experimental import pallas as pl
from jax.experimental.pallas import tpu as pltpu

_NEG_INF = -1.0e9


# ----------------------------------------------------------------------------
# Pass 1: row-softmax stats (full S per tile) + online column-softmax stats.
# ----------------------------------------------------------------------------
def _stats_kernel(f0_ref, f1_ref,
                  m1_ref, r1_ref, i01_ref,          # per-row outputs
                  m0_ref, s0_ref, r0_ref, i10_ref,  # per-column outputs (acc over l)
                  *, scale, l_valid):
    l = pl.program_id(1)
    nlt = pl.num_programs(1)
    tl = f0_ref.shape[1]
    S = f1_ref.shape[2]

    f0 = f0_ref[0]                                   # (TL, C) bf16
    f1 = f1_ref[0]                                   # (C, S)  bf16
    sim = lax.dot_general(f0, f1, (((1,), (0,)), ((), ())),
                          preferred_element_type=jnp.float32) * scale   # (TL, S)

    if l_valid is not None:                          # mask zero-padded rows
        row_ids = lax.broadcasted_iota(jnp.int32, (tl, 1), 0) + l * tl
        sim = jnp.where(row_ids < l_valid, sim, _NEG_INF)

    # --- softmax over S (torch dim=2): full row is inside this tile ---
    m1 = jnp.max(sim, axis=1, keepdims=True)                            # (TL, 1)
    s1 = jnp.sum(jnp.exp(sim - m1), axis=1, keepdims=True)
    iota_s = lax.broadcasted_iota(jnp.int32, sim.shape, 1)
    m1_ref[0] = m1
    r1_ref[0] = 1.0 / s1          # = max_j softmax(sim, axis=S)[i, j]
    i01_ref[0] = jnp.min(jnp.where(sim == m1, iota_s, S), axis=1, keepdims=True)

    # --- softmax over L (torch dim=1): online accumulation across L tiles ---
    tmax = jnp.max(sim, axis=0, keepdims=True)                          # (1, S)
    tsum = jnp.sum(jnp.exp(sim - tmax), axis=0, keepdims=True)
    iota_l = lax.broadcasted_iota(jnp.int32, sim.shape, 0)
    targ = jnp.min(jnp.where(sim == tmax, iota_l, tl), axis=0, keepdims=True) + l * tl

    @pl.when(l == 0)
    def _():
        m0_ref[0] = tmax
        s0_ref[0] = tsum
        i10_ref[0] = targ

    @pl.when(l > 0)
    def _():
        m_old = m0_ref[0]
        m_new = jnp.maximum(m_old, tmax)
        s0_ref[0] = (s0_ref[0] * jnp.exp(m_old - m_new)
                     + tsum * jnp.exp(tmax - m_new))
        i10_ref[0] = jnp.where(tmax > m_old, targ, i10_ref[0])   # first index on ties
        m0_ref[0] = m_new

    @pl.when(l == nlt - 1)
    def _():
        r0_ref[0] = 1.0 / s0_ref[0]   # = max_i softmax(sim, axis=L)[i, j]


# ----------------------------------------------------------------------------
# Pass 2: conf tile (single exp/element) + reduced match statistics.
# ----------------------------------------------------------------------------
def _conf_kernel(f0_ref, f1_ref, m0_ref, r0_ref, m1_ref, r1_ref,
                 conf_ref, rmax_ref, rarg_ref, cmaxp_ref, *, scale, l_valid):
    l = pl.program_id(1)
    tl = conf_ref.shape[1]
    S = conf_ref.shape[2]

    f0 = f0_ref[0]
    f1 = f1_ref[0]
    sim = lax.dot_general(f0, f1, (((1,), (0,)), ((), ())),
                          preferred_element_type=jnp.float32) * scale   # (TL, S)

    if l_valid is not None:
        row_ids = lax.broadcasted_iota(jnp.int32, (tl, 1), 0) + l * tl
        sim = jnp.where(row_ids < l_valid, sim, _NEG_INF)

    m1 = m1_ref[0]                    # (TL, 1)
    r1 = r1_ref[0]                    # (TL, 1)  = 1/s1
    m0 = m0_ref[0]                    # (1, S)
    r0 = r0_ref[0]                    # (1, S)   = 1/s0

    # conf = softmax_S * softmax_L ; 2*sim - m1 - m0 <= 0 so exp is safe.
    conf = jnp.exp(2.0 * sim - m1 - m0) * r1 * r0
    conf_ref[0] = conf

    # reduced statistics consumed by pass 3 (no dense conf re-read needed)
    rmax = jnp.max(conf, axis=1, keepdims=True)                         # (TL, 1)
    iota_s = lax.broadcasted_iota(jnp.int32, conf.shape, 1)
    rmax_ref[0] = rmax
    rarg_ref[0] = jnp.min(jnp.where(conf == rmax, iota_s, S),
                          axis=1, keepdims=True)                        # (TL, 1)
    cmaxp_ref[0] = jnp.max(conf, axis=0, keepdims=True)                 # (1, S)


# ----------------------------------------------------------------------------
# Pass 3: argmax-based mutual-NN + threshold + border mask on reduced vectors.
# ----------------------------------------------------------------------------
def _match_kernel(rmax_ref, rarg_ref, cmax_ref, valid_ref, jidx_ref,
                  *, thr, border_rm, h0c, w0c, h1c, w1c, l_valid):
    l = pl.program_id(1)
    tl = rmax_ref.shape[1]
    S = cmax_ref.shape[2]

    rmax = rmax_ref[0]                # (TL, 1) row max of conf
    rarg = rarg_ref[0]                # (TL, 1) row argmax j*
    cmax = cmax_ref[0]                # (1, S)  global column max of conf

    bd = border_rm
    row_ids = lax.broadcasted_iota(jnp.int32, (tl, 1), 0) + l * tl
    ih, iw = row_ids // w0c, row_ids % w0c
    valid_i = (ih >= bd) & (ih < h0c - bd) & (iw >= bd) & (iw < w0c - bd)
    if l_valid is not None:
        valid_i = valid_i & (row_ids < l_valid)

    jh, jw = rarg // w1c, rarg % w1c
    valid_j = (jh >= bd) & (jh < h1c - bd) & (jw >= bd) & (jw < w1c - bd)

    # gather cmax[j*] via one-hot select + sum over S (exact: single hit per row)
    iota_s = lax.broadcasted_iota(jnp.int32, (tl, S), 1)
    cmax_at_j = jnp.sum(jnp.where(iota_s == rarg, cmax, 0.0),
                        axis=1, keepdims=True)                          # (TL, 1)

    # rmax <= cmax_at_j always, so ">=" is exact mutual-NN equality.
    ok = (rmax > thr) & valid_i & valid_j & (rmax >= cmax_at_j)
    valid_ref[0] = ok.astype(jnp.int32)
    jidx_ref[0] = jnp.where(ok, rarg, 0)


# ----------------------------------------------------------------------------
# Wrapper
# ----------------------------------------------------------------------------
def _choose_tile(L, tile_l):
    """Largest multiple-of-8 divisor of L <= tile_l, else pad L to tile multiple."""
    best = None
    for t in range(8, min(tile_l, L) + 1, 8):
        if L % t == 0:
            best = t
    if best is not None:
        return best, 0
    tl = max(8, (tile_l // 8) * 8)
    lp = ((L + tl - 1) // tl) * tl
    return tl, lp - L


def _vmem_budget():
    try:
        cap = pltpu.get_tpu_info().vmem_capacity_bytes
    except Exception:
        cap = 128 * 1024 * 1024
    # <=3/4 of physical VMEM (48 MiB on v7x), capped at 96 MiB on v5e/v6e.
    return min(int(cap * 3 // 4), 96 * 1024 * 1024)


def coarse_matching_pallas(feat_c0, feat_c1, *, temperature, thr, border_rm,
                           hw0_c, hw1_c, tile_l=256):
    N, L, C = feat_c0.shape
    S = feat_c1.shape[1]
    h0c, w0c = hw0_c
    h1c, w1c = hw1_c
    assert L == h0c * w0c and S == h1c * w1c

    budget = _vmem_budget()

    def footprint(t):
        # double-buffered conf out + f1t + f0 + ~3 live (t,S) f32 temps + stats
        return (2 * t * S * 4 + 2 * C * S * 2 + 2 * t * C * 2
                + 3 * t * S * 4 + 8 * S * 4)

    cur = max(8, (tile_l // 8) * 8)
    tl, pad = _choose_tile(L, cur)
    while footprint(tl) > budget and cur > 8:
        cur = max(8, cur // 2)
        tl, pad = _choose_tile(L, cur)

    Lp = L + pad
    nlt = Lp // tl
    l_valid = L if pad > 0 else None
    scale = 1.0 / (float(C) * float(temperature))

    # MXU-friendly operands: bf16, rhs pre-transposed to (N, C, S).
    f0 = feat_c0.astype(jnp.bfloat16)
    if pad > 0:
        f0 = jnp.pad(f0, ((0, 0), (0, pad), (0, 0)))
    f1t = jnp.swapaxes(feat_c1, 1, 2).astype(jnp.bfloat16)      # (N, C, S)

    grid = (N, nlt)
    f0_spec = pl.BlockSpec((1, tl, C), lambda n, l: (n, l, 0))
    f1_spec = pl.BlockSpec((1, C, S), lambda n, l: (n, 0, 0))
    colvec = pl.BlockSpec((1, 1, S), lambda n, l: (n, 0, 0))
    rowvec = pl.BlockSpec((1, tl, 1), lambda n, l: (n, l, 0))
    conf_spec = pl.BlockSpec((1, tl, S), lambda n, l: (n, l, 0))
    cmaxp_spec = pl.BlockSpec((1, 1, S), lambda n, l: (n, l, 0))

    cparams = dict(vmem_limit_bytes=budget)

    # ---- pass 1: row stats + online column stats over L tiles ----
    m1, r1, i01, m0, _s0, r0, i10 = pl.pallas_call(
        functools.partial(_stats_kernel, scale=scale, l_valid=l_valid),
        out_shape=(jax.ShapeDtypeStruct((N, Lp, 1), jnp.float32),
                   jax.ShapeDtypeStruct((N, Lp, 1), jnp.float32),
                   jax.ShapeDtypeStruct((N, Lp, 1), jnp.int32),
                   jax.ShapeDtypeStruct((N, 1, S), jnp.float32),
                   jax.ShapeDtypeStruct((N, 1, S), jnp.float32),
                   jax.ShapeDtypeStruct((N, 1, S), jnp.float32),
                   jax.ShapeDtypeStruct((N, 1, S), jnp.int32)),
        grid_spec=pltpu.PrefetchScalarGridSpec(
            num_scalar_prefetch=0, grid=grid,
            in_specs=[f0_spec, f1_spec],
            out_specs=(rowvec, rowvec, rowvec, colvec, colvec, colvec, colvec)),
        compiler_params=pltpu.CompilerParams(
            dimension_semantics=("parallel", "arbitrary"), **cparams),
    )(f0, f1t)

    # ---- pass 2: conf matrix + reduced match stats (fully parallel) ----
    conf, rmax, rarg, cmax_part = pl.pallas_call(
        functools.partial(_conf_kernel, scale=scale, l_valid=l_valid),
        out_shape=(jax.ShapeDtypeStruct((N, Lp, S), jnp.float32),
                   jax.ShapeDtypeStruct((N, Lp, 1), jnp.float32),
                   jax.ShapeDtypeStruct((N, Lp, 1), jnp.int32),
                   jax.ShapeDtypeStruct((N, nlt, S), jnp.float32)),
        grid_spec=pltpu.PrefetchScalarGridSpec(
            num_scalar_prefetch=0, grid=grid,
            in_specs=[f0_spec, f1_spec, colvec, colvec, rowvec, rowvec],
            out_specs=(conf_spec, rowvec, rowvec, cmaxp_spec)),
        compiler_params=pltpu.CompilerParams(
            dimension_semantics=("parallel", "parallel"), **cparams),
    )(f0, f1t, m0, r0, m1, r1)

    # tiny XLA reduce of per-tile column-max partials -> global column max
    cmax = jnp.max(cmax_part, axis=1, keepdims=True)              # (N, 1, S)

    # ---- pass 3: mutual-NN + thr + border on reduced vectors only ----
    valid, jidx = pl.pallas_call(
        functools.partial(_match_kernel, thr=float(thr), border_rm=int(border_rm),
                          h0c=h0c, w0c=w0c, h1c=h1c, w1c=w1c, l_valid=l_valid),
        out_shape=(jax.ShapeDtypeStruct((N, Lp, 1), jnp.int32),
                   jax.ShapeDtypeStruct((N, Lp, 1), jnp.int32)),
        grid_spec=pltpu.PrefetchScalarGridSpec(
            num_scalar_prefetch=0, grid=grid,
            in_specs=[rowvec, rowvec, colvec],
            out_specs=(rowvec, rowvec)),
        compiler_params=pltpu.CompilerParams(
            dimension_semantics=("parallel", "parallel"), **cparams),
    )(rmax, rarg, cmax)

    conf_out = conf[:, :L, :] if pad > 0 else conf
    return {
        "conf_matrix": conf_out,
        "next_conf_c01": r1[:, :L, 0],
        "next_idx_c01": i01[:, :L, 0],
        "next_conf_c10": r0[:, 0, :],
        "next_idx_c10": i10[:, 0, :],
        "match_valid": valid[:, :L, 0],
        "match_j": jidx[:, :L, 0],
    }


def extract_matches_host(conf, match_valid, match_j, *, hw0_c, hw1_c, hw0_i):
    """Dynamic-shape match extraction (torch.where equivalent), host-side."""
    # TODO(synk): variable-length match extraction (torch.where / boolean
    # indexing) has no static-shape Pallas equivalent; done host-side.
    conf = np.asarray(conf)
    valid = np.asarray(match_valid) > 0
    all_j = np.asarray(match_j)
    b_ids, i_ids = np.nonzero(valid)
    j_ids = all_j[b_ids, i_ids]
    mconf = conf[b_ids, i_ids, j_ids]

    scale = hw0_i[0] / hw0_c[0]
    mkpts0_c = np.stack([i_ids % hw0_c[1], i_ids // hw0_c[1]], axis=1) * scale
    mkpts1_c = np.stack([j_ids % hw1_c[1], j_ids // hw1_c[1]], axis=1) * scale

    sel = mconf != 0
    return {
        "b_ids": b_ids, "i_ids": i_ids, "j_ids": j_ids,
        "gt_mask": mconf == 0,
        "m_bids": b_ids[sel],
        "mkpts0_c": mkpts0_c[sel],
        "mkpts1_c": mkpts1_c[sel],
        "mconf": mconf[sel],
    }


def reference_jax(feat_c0, feat_c1, temperature):
    """Plain-JAX reference using the same bf16 MXU contraction precision."""
    C = feat_c0.shape[-1]
    scale = 1.0 / (float(C) * float(temperature))
    sim = jnp.einsum("nlc,nsc->nls",
                     feat_c0.astype(jnp.bfloat16),
                     feat_c1.astype(jnp.bfloat16),
                     preferred_element_type=jnp.float32) * scale
    sm10 = jax.nn.softmax(sim, axis=1)
    sm01 = jax.nn.softmax(sim, axis=2)
    return sm10 * sm01, sm01, sm10


def _run_case(N, C, hw0_c, hw1_c, tile_l, *, thr, border_rm, temperature, key):
    h0c, w0c = hw0_c
    h1c, w1c = hw1_c
    L, S = h0c * w0c, h1c * w1c

    k0, k1 = jax.random.split(key)
    feat_c0 = jax.random.normal(k0, (N, L, C), dtype=jnp.float32)
    feat_c1 = jax.random.normal(k1, (N, S, C), dtype=jnp.float32)

    out = coarse_matching_pallas(feat_c0, feat_c1, temperature=temperature,
                                 thr=thr, border_rm=border_rm,
                                 hw0_c=hw0_c, hw1_c=hw1_c, tile_l=tile_l)
    jax.block_until_ready(out["conf_matrix"])

    # ---- correctness vs plain-JAX reference of the dense hot path ----
    conf_ref, sm01_ref, sm10_ref = reference_jax(feat_c0, feat_c1, temperature)
    conf_ref = np.asarray(conf_ref)
    sm01_ref = np.asarray(sm01_ref)
    sm10_ref = np.asarray(sm10_ref)

    np.testing.assert_allclose(np.asarray(out["conf_matrix"]), conf_ref,
                               atol=5e-5, rtol=1e-4)
    np.testing.assert_allclose(np.asarray(out["next_conf_c01"]),
                               sm01_ref.max(axis=2), atol=5e-5, rtol=1e-4)
    np.testing.assert_allclose(np.asarray(out["next_conf_c10"]),
                               sm10_ref.max(axis=1), atol=5e-5, rtol=1e-4)

    # argmax indices validated by value (robust to fp near-ties)
    i01 = np.asarray(out["next_idx_c01"]).astype(np.int64)
    i10 = np.asarray(out["next_idx_c10"]).astype(np.int64)
    np.testing.assert_allclose(
        np.take_along_axis(sm01_ref, i01[:, :, None], axis=2)[..., 0],
        sm01_ref.max(axis=2), atol=5e-5, rtol=1e-4)
    np.testing.assert_allclose(
        np.take_along_axis(sm10_ref, i10[:, None, :], axis=1)[:, 0, :],
        sm10_ref.max(axis=1), atol=5e-5, rtol=1e-4)

    # ---- exact check of the match pipeline on the kernel's own conf ----
    conf_k = np.asarray(out["conf_matrix"])
    bd = border_rm
    mask = conf_k > thr
    m5 = mask.reshape(N, h0c, w0c, h1c, w1c)
    m5[:, :bd] = False; m5[:, h0c - bd:] = False
    m5[:, :, :bd] = False; m5[:, :, w0c - bd:] = False
    m5[:, :, :, :bd] = False; m5[:, :, :, h1c - bd:] = False
    m5[..., :bd] = False; m5[..., w1c - bd:] = False
    mask = m5.reshape(N, L, S)
    mask = (mask
            & (conf_k == conf_k.max(axis=2, keepdims=True))
            & (conf_k == conf_k.max(axis=1, keepdims=True)))
    mask_v_ref = mask.any(axis=2)
    all_j_ref = mask.argmax(axis=2)
    np.testing.assert_array_equal(np.asarray(out["match_valid"]) > 0, mask_v_ref)
    np.testing.assert_array_equal(
        np.asarray(out["match_j"])[mask_v_ref], all_j_ref[mask_v_ref])

    return out


if __name__ == "__main__":
    config = dict(thr=0.005, border_rm=2, dsmax_temperature=0.1,
                  match_type="dual_softmax",
                  train_coarse_percent=0.4, train_pad_num_gt_min=200)

    key = jax.random.PRNGKey(0)
    k_a, k_b = jax.random.split(key)

    # case 1: L = S = 256, tile 128  -> exercises the multi-tile (nlt=2) path.
    out = _run_case(2, 32, (16, 16), (16, 16), 128,
                    thr=config["thr"], border_rm=config["border_rm"],
                    temperature=config["dsmax_temperature"], key=k_a)

    matches = extract_matches_host(out["conf_matrix"], out["match_valid"],
                                   out["match_j"],
                                   hw0_c=(16, 16), hw1_c=(16, 16),
                                   hw0_i=(128, 128))
    _ = matches["mkpts0_c"], matches["mkpts1_c"], matches["mconf"]

    # case 2: L = 100 (10x10, not a multiple of 8 divisor), S = 144, tile 64
    #         -> exercises the L-padding + masking path with nlt=2.
    _run_case(1, 32, (10, 10), (12, 12), 64,
              thr=config["thr"], border_rm=config["border_rm"],
              temperature=config["dsmax_temperature"], key=k_b)

    print("KERNEL_OK")
</pallas_src>

<mosaic_0001>
module attributes {stable_mosaic.version = 11 : i64} {
  func.func @_stats_kernel(%arg0: i32, %arg1: i32, %arg2: memref<1x128x32xbf16, #tpu.memory_space<vmem>>, %arg3: memref<1x32x256xbf16, #tpu.memory_space<vmem>>, %arg4: memref<1x128x1xf32, #tpu.memory_space<vmem>>, %arg5: memref<1x128x1xf32, #tpu.memory_space<vmem>>, %arg6: memref<1x128x1xi32, #tpu.memory_space<vmem>>, %arg7: memref<1x1x256xf32, #tpu.memory_space<vmem>>, %arg8: memref<1x1x256xf32, #tpu.memory_space<vmem>>, %arg9: memref<1x1x256xf32, #tpu.memory_space<vmem>>, %arg10: memref<1x1x256xi32, #tpu.memory_space<vmem>>) attributes {dimension_semantics = [#tpu.dimension_semantics<parallel>, #tpu.dimension_semantics<arbitrary>], iteration_bounds = array<i64: 2, 2>, scalar_prefetch = 0 : i64, scratch_operands = 0 : i64, tpu.core_type = #tpu.core_type<tc>, window_params = [{transform_indices = @transform_0, window_bounds = array<i64: 1, 128, 32>}, {transform_indices = @transform_1, window_bounds = array<i64: 1, 32, 256>}, {transform_indices = @transform_2, window_bounds = array<i64: 1, 128, 1>}, {transform_indices = @transform_3, window_bounds = array<i64: 1, 128, 1>}, {transform_indices = @transform_4, window_bounds = array<i64: 1, 128, 1>}, {transform_indices = @transform_5, window_bounds = array<i64: 1, 1, 256>}, {transform_indices = @transform_6, window_bounds = array<i64: 1, 1, 256>}, {transform_indices = @transform_7, window_bounds = array<i64: 1, 1, 256>}, {transform_indices = @transform_8, window_bounds = array<i64: 1, 1, 256>}]} {
    %c0 = arith.constant 0 : index
    %c0_0 = arith.constant 0 : index
    %c0_1 = arith.constant 0 : index
    %0 = vector.load %arg2[%c0, %c0_0, %c0_1] : memref<1x128x32xbf16, #tpu.memory_space<vmem>>, vector<1x128x32xbf16>
    %1 = vector.shape_cast %0 : vector<1x128x32xbf16> to vector<128x32xbf16>
    %c0_2 = arith.constant 0 : index
    %c0_3 = arith.constant 0 : index
    %c0_4 = arith.constant 0 : index
    %2 = vector.load %arg3[%c0_2, %c0_3, %c0_4] : memref<1x32x256xbf16, #tpu.memory_space<vmem>>, vector<1x32x256xbf16>
    %3 = vector.shape_cast %2 : vector<1x32x256xbf16> to vector<32x256xbf16>
    %cst = arith.constant dense<0.000000e+00> : vector<128x256xf32>
    %4 = tpu.matmul %1, %3, %cst {dimension_numbers = #tpu.dot_dimension_numbers<[1], [0], [0], [1], [0, 0, 1, 1], [], []>} : vector<128x32xbf16>, vector<32x256xbf16>, vector<128x256xf32> -> vector<128x256xf32>
    %cst_5 = arith.constant 3.125000e-01 : f32
    %5 = vector.broadcast %cst_5 : f32 to vector<128x256xf32>
    %6 = arith.mulf %4, %5 : vector<128x256xf32>
    %cst_6 = arith.constant dense<0xFF800000> : vector<128xf32>
    %7 = vector.multi_reduction <maximumf>, %6, %cst_6 [1] : vector<128x256xf32> to vector<128xf32>
    %8 = vector.shape_cast %7 : vector<128xf32> to vector<128x1xf32>
    %9 = vector.broadcast %8 : vector<128x1xf32> to vector<128x256xf32>
    %10 = arith.subf %6, %9 : vector<128x256xf32>
    %11 = math.exp %10 : vector<128x256xf32>
    %cst_7 = arith.constant dense<0.000000e+00> : vector<128xf32>
    %12 = vector.multi_reduction <add>, %11, %cst_7 [1] : vector<128x256xf32> to vector<128xf32>
    %13 = vector.shape_cast %12 : vector<128xf32> to vector<128x1xf32>
    %14 = tpu.iota {dimensions = array<i32: 1>} : vector<128x256xi32>
    %c0_8 = arith.constant 0 : index
    %c0_9 = arith.constant 0 : index
    %c0_10 = arith.constant 0 : index
    %15 = vector.load %arg4[%c0_8, %c0_9, %c0_10] : memref<1x128x1xf32, #tpu.memory_space<vmem>>, vector<1x128x1xf32>
    %16 = vector.shape_cast %15 : vector<1x128x1xf32> to vector<128x1xf32>
    %17 = vector.shape_cast %8 : vector<128x1xf32> to vector<1x128x1xf32>
    tpu.vector_store %arg4[%c0_8, %c0_9, %c0_10], %17 {strides = array<i32>} : memref<1x128x1xf32, #tpu.memory_space<vmem>>, vector<1x128x1xf32>,
    %cst_11 = arith.constant 1.000000e+00 : f32
    %18 = vector.broadcast %cst_11 : f32 to vector<128x1xf32>
    %19 = arith.divf %18, %13 : vector<128x1xf32>
    %c0_12 = arith.constant 0 : index
    %c0_13 = arith.constant 0 : index
    %c0_14 = arith.constant 0 : index
    %20 = vector.load %arg5[%c0_12, %c0_13, %c0_14] : memref<1x128x1xf32, #tpu.memory_space<vmem>>, vector<1x128x1xf32>
    %21 = vector.shape_cast %20 : vector<1x128x1xf32> to vector<128x1xf32>
    %22 = vector.shape_cast %19 : vector<128x1xf32> to vector<1x128x1xf32>
    tpu.vector_store %arg5[%c0_12, %c0_13, %c0_14], %22 {strides = array<i32>} : memref<1x128x1xf32, #tpu.memory_space<vmem>>, vector<1x128x1xf32>,
    %23 = vector.broadcast %8 : vector<128x1xf32> to vector<128x256xf32>
    %24 = arith.cmpf oeq, %6, %23 : vector<128x256xf32>
    %c256_i32 = arith.constant 256 : i32
    %25 = vector.broadcast %c256_i32 : i32 to vector<128x256xi32>
    %26 = arith.select %24, %14, %25 : vector<128x256xi1>, vector<128x256xi32>
    %cst_15 = arith.constant dense<2147483647> : vector<128xi32>
    %27 = vector.multi_reduction <minsi>, %26, %cst_15 [1] : vector<128x256xi32> to vector<128xi32>
    %28 = vector.shape_cast %27 : vector<128xi32> to vector<128x1xi32>
    %c0_16 = arith.constant 0 : index
    %c0_17 = arith.constant 0 : index
    %c0_18 = arith.constant 0 : index
    %29 = vector.load %arg6[%c0_16, %c0_17, %c0_18] : memref<1x128x1xi32, #tpu.memory_space<vmem>>, vector<1x128x1xi32>
    %30 = vector.shape_cast %29 : vector<1x128x1xi32> to vector<128x1xi32>
    %31 = vector.shape_cast %28 : vector<128x1xi32> to vector<1x128x1xi32>
    tpu.vector_store %arg6[%c0_16, %c0_17, %c0_18], %31 {strides = array<i32>} : memref<1x128x1xi32, #tpu.memory_space<vmem>>, vector<1x128x1xi32>,
    %cst_19 = arith.constant dense<0xFF800000> : vector<256xf32>
    %32 = vector.multi_reduction <maximumf>, %6, %cst_19 [0] : vector<128x256xf32> to vector<256xf32>
    %33 = vector.shape_cast %32 : vector<256xf32> to vector<1x256xf32>
    %34 = vector.broadcast %33 : vector<1x256xf32> to vector<128x256xf32>
    %35 = arith.subf %6, %34 : vector<128x256xf32>
    %36 = math.exp %35 : vector<128x256xf32>
    %cst_20 = arith.constant dense<0.000000e+00> : vector<256xf32>
    %37 = vector.multi_reduction <add>, %36, %cst_20 [0] : vector<128x256xf32> to vector<256xf32>
    %38 = vector.shape_cast %37 : vector<256xf32> to vector<1x256xf32>
    %39 = tpu.iota {dimensions = array<i32: 0>} : vector<128x256xi32>
    %40 = vector.broadcast %33 : vector<1x256xf32> to vector<128x256xf32>
    %41 = arith.cmpf oeq, %6, %40 : vector<128x256xf32>
    %c128_i32 = arith.constant 128 : i32
    %42 = vector.broadcast %c128_i32 : i32 to vector<128x256xi32>
    %43 = arith.select %41, %39, %42 : vector<128x256xi1>, vector<128x256xi32>
    %cst_21 = arith.constant dense<2147483647> : vector<256xi32>
    %44 = vector.multi_reduction <minsi>, %43, %cst_21 [0] : vector<128x256xi32> to vector<256xi32>
    %45 = vector.shape_cast %44 : vector<256xi32> to vector<1x256xi32>
    %c128_i32_22 = arith.constant 128 : i32
    %46 = arith.muli %arg1, %c128_i32_22 : i32
    %47 = vector.broadcast %46 : i32 to vector<1x256xi32>
    %48 = arith.addi %45, %47 : vector<1x256xi32>
    %c0_i32 = arith.constant 0 : i32
    %49 = arith.cmpi eq, %arg1, %c0_i32 : i32
    %50 = arith.extui %49 : i1 to i32
    %c0_i32_23 = arith.constant 0 : i32
    %51 = arith.cmpi ne, %50, %c0_i32_23 : i32
    scf.if %51 {
      %c0_27 = arith.constant 0 : index
      %c0_28 = arith.constant 0 : index
      %c0_29 = arith.constant 0 : index
      %58 = vector.load %arg7[%c0_27, %c0_28, %c0_29] : memref<1x1x256xf32, #tpu.memory_space<vmem>>, vector<1x1x256xf32>
      %59 = vector.shape_cast %58 : vector<1x1x256xf32> to vector<1x256xf32>
      %60 = vector.shape_cast %33 : vector<1x256xf32> to vector<1x1x256xf32>
      tpu.vector_store %arg7[%c0_27, %c0_28, %c0_29], %60 {strides = array<i32>} : memref<1x1x256xf32, #tpu.memory_space<vmem>>, vector<1x1x256xf32>,
      %c0_30 = arith.constant 0 : index
      %c0_31 = arith.constant 0 : index
      %c0_32 = arith.constant 0 : index
      %61 = vector.load %arg8[%c0_30, %c0_31, %c0_32] : memref<1x1x256xf32, #tpu.memory_space<vmem>>, vector<1x1x256xf32>
      %62 = vector.shape_cast %61 : vector<1x1x256xf32> to vector<1x256xf32>
      %63 = vector.shape_cast %38 : vector<1x256xf32> to vector<1x1x256xf32>
      tpu.vector_store %arg8[%c0_30, %c0_31, %c0_32], %63 {strides = array<i32>} : memref<1x1x256xf32, #tpu.memory_space<vmem>>, vector<1x1x256xf32>,
      %c0_33 = arith.constant 0 : index
      %c0_34 = arith.constant 0 : index
      %c0_35 = arith.constant 0 : index
      %64 = vector.load %arg10[%c0_33, %c0_34, %c0_35] : memref<1x1x256xi32, #tpu.memory_space<vmem>>, vector<1x1x256xi32>
      %65 = vector.shape_cast %64 : vector<1x1x256xi32> to vector<1x256xi32>
      %66 = vector.shape_cast %48 : vector<1x256xi32> to vector<1x1x256xi32>
      tpu.vector_store %arg10[%c0_33, %c0_34, %c0_35], %66 {strides = array<i32>} : memref<1x1x256xi32, #tpu.memory_space<vmem>>, vector<1x1x256xi32>,
    } else {
    }
    %c0_i32_24 = arith.constant 0 : i32
    %52 = arith.cmpi sgt, %arg1, %c0_i32_24 : i32
    %53 = arith.extui %52 : i1 to i32
    %c0_i32_25 = arith.constant 0 : i32
    %54 = arith.cmpi ne, %53, %c0_i32_25 : i32
    scf.if %54 {
      %c0_27 = arith.constant 0 : index
      %c0_28 = arith.constant 0 : index
      %c0_29 = arith.constant 0 : index
      %58 = vector.load %arg7[%c0_27, %c0_28, %c0_29] : memref<1x1x256xf32, #tpu.memory_space<vmem>>, vector<1x1x256xf32>
      %59 = vector.shape_cast %58 : vector<1x1x256xf32> to vector<1x256xf32>
      %60 = arith.maximumf %59, %33 : vector<1x256xf32>
      %c0_30 = arith.constant 0 : index
      %c0_31 = arith.constant 0 : index
      %c0_32 = arith.constant 0 : index
      %61 = vector.load %arg8[%c0_30, %c0_31, %c0_32] : memref<1x1x256xf32, #tpu.memory_space<vmem>>, vector<1x1x256xf32>
      %62 = vector.shape_cast %61 : vector<1x1x256xf32> to vector<1x256xf32>
      %63 = arith.subf %59, %60 : vector<1x256xf32>
      %64 = math.exp %63 : vector<1x256xf32>
      %65 = arith.mulf %62, %64 : vector<1x256xf32>
      %66 = arith.subf %33, %60 : vector<1x256xf32>
      %67 = math.exp %66 : vector<1x256xf32>
      %68 = arith.mulf %38, %67 : vector<1x256xf32>
      %69 = arith.addf %65, %68 : vector<1x256xf32>
      %c0_33 = arith.constant 0 : index
      %c0_34 = arith.constant 0 : index
      %c0_35 = arith.constant 0 : index
      %70 = vector.load %arg8[%c0_33, %c0_34, %c0_35] : memref<1x1x256xf32, #tpu.memory_space<vmem>>, vector<1x1x256xf32>
      %71 = vector.shape_cast %70 : vector<1x1x256xf32> to vector<1x256xf32>
      %72 = vector.shape_cast %69 : vector<1x256xf32> to vector<1x1x256xf32>
      tpu.vector_store %arg8[%c0_33, %c0_34, %c0_35], %72 {strides = array<i32>} : memref<1x1x256xf32, #tpu.memory_space<vmem>>, vector<1x1x256xf32>,
      %73 = arith.cmpf ogt, %33, %59 : vector<1x256xf32>
      %c0_36 = arith.constant 0 : index
      %c0_37 = arith.constant 0 : index
      %c0_38 = arith.constant 0 : index
      %74 = vector.load %arg10[%c0_36, %c0_37, %c0_38] : memref<1x1x256xi32, #tpu.memory_space<vmem>>, vector<1x1x256xi32>
      %75 = vector.shape_cast %74 : vector<1x1x256xi32> to vector<1x256xi32>
      %76 = arith.select %73, %48, %75 : vector<1x256xi1>, vector<1x256xi32>
      %c0_39 = arith.constant 0 : index
      %c0_40 = arith.constant 0 : index
      %c0_41 = arith.constant 0 : index
      %77 = vector.load %arg10[%c0_39, %c0_40, %c0_41] : memref<1x1x256xi32, #tpu.memory_space<vmem>>, vector<1x1x256xi32>
      %78 = vector.shape_cast %77 : vector<1x1x256xi32> to vector<1x256xi32>
      %79 = vector.shape_cast %76 : vector<1x256xi32> to vector<1x1x256xi32>
      tpu.vector_store %arg10[%c0_39, %c0_40, %c0_41], %79 {strides = array<i32>} : memref<1x1x256xi32, #tpu.memory_space<vmem>>, vector<1x1x256xi32>,
      %c0_42 = arith.constant 0 : index
      %c0_43 = arith.constant 0 : index
      %c0_44 = arith.constant 0 : index
      %80 = vector.load %arg7[%c0_42, %c0_43, %c0_44] : memref<1x1x256xf32, #tpu.memory_space<vmem>>, vector<1x1x256xf32>
      %81 = vector.shape_cast %80 : vector<1x1x256xf32> to vector<1x256xf32>
      %82 = vector.shape_cast %60 : vector<1x256xf32> to vector<1x1x256xf32>
      tpu.vector_store %arg7[%c0_42, %c0_43, %c0_44], %82 {strides = array<i32>} : memref<1x1x256xf32, #tpu.memory_space<vmem>>, vector<1x1x256xf32>,
    } else {
    }
    %c1_i32 = arith.constant 1 : i32
    %55 = arith.cmpi eq, %arg1, %c1_i32 : i32
    %56 = arith.extui %55 : i1 to i32
    %c0_i32_26 = arith.constant 0 : i32
    %57 = arith.cmpi ne, %56, %c0_i32_26 : i32
    scf.if %57 {
      %c0_27 = arith.constant 0 : index
      %c0_28 = arith.constant 0 : index
      %c0_29 = arith.constant 0 : index
      %58 = vector.load %arg8[%c0_27, %c0_28, %c0_29] : memref<1x1x256xf32, #tpu.memory_space<vmem>>, vector<1x1x256xf32>
      %59 = vector.shape_cast %58 : vector<1x1x256xf32> to vector<1x256xf32>
      %cst_30 = arith.constant 1.000000e+00 : f32
      %60 = vector.broadcast %cst_30 : f32 to vector<1x256xf32>
      %61 = arith.divf %60, %59 : vector<1x256xf32>
      %c0_31 = arith.constant 0 : index
      %c0_32 = arith.constant 0 : index
      %c0_33 = arith.constant 0 : index
      %62 = vector.load %arg9[%c0_31, %c0_32, %c0_33] : memref<1x1x256xf32, #tpu.memory_space<vmem>>, vector<1x1x256xf32>
      %63 = vector.shape_cast %62 : vector<1x1x256xf32> to vector<1x256xf32>
      %64 = vector.shape_cast %61 : vector<1x256xf32> to vector<1x1x256xf32>
      tpu.vector_store %arg9[%c0_31, %c0_32, %c0_33], %64 {strides = array<i32>} : memref<1x1x256xf32, #tpu.memory_space<vmem>>, vector<1x1x256xf32>,
    } else {
    }
    return
  }
  func.func @transform_0(%arg0: i32, %arg1: i32) -> (i32, i32, i32) {
    %c0_i32 = arith.constant 0 : i32
    %c0_i32_0 = arith.constant 0 : i32
    return %arg0, %arg1, %c0_i32 : i32, i32, i32
  }
  func.func @transform_1(%arg0: i32, %arg1: i32) -> (i32, i32, i32) {
    %c0_i32 = arith.constant 0 : i32
    %c0_i32_0 = arith.constant 0 : i32
    %c0_i32_1 = arith.constant 0 : i32
    return %arg0, %c0_i32, %c0_i32_0 : i32, i32, i32
  }
  func.func @transform_2(%arg0: i32, %arg1: i32) -> (i32, i32, i32) {
    %c0_i32 = arith.constant 0 : i32
    %c0_i32_0 = arith.constant 0 : i32
    return %arg0, %arg1, %c0_i32 : i32, i32, i32
  }
  func.func @transform_3(%arg0: i32, %arg1: i32) -> (i32, i32, i32) {
    %c0_i32 = arith.constant 0 : i32
    %c0_i32_0 = arith.constant 0 : i32
    return %arg0, %arg1, %c0_i32 : i32, i32, i32
  }
  func.func @transform_4(%arg0: i32, %arg1: i32) -> (i32, i32, i32) {
    %c0_i32 = arith.constant 0 : i32
    %c0_i32_0 = arith.constant 0 : i32
    return %arg0, %arg1, %c0_i32 : i32, i32, i32
  }
  func.func @transform_5(%arg0: i32, %arg1: i32) -> (i32, i32, i32) {
    %c0_i32 = arith.constant 0 : i32
    %c0_i32_0 = arith.constant 0 : i32
    %c0_i32_1 = arith.constant 0 : i32
    return %arg0, %c0_i32, %c0_i32_0 : i32, i32, i32
  }
  func.func @transform_6(%arg0: i32, %arg1: i32) -> (i32, i32, i32) {
    %c0_i32 = arith.constant 0 : i32
    %c0_i32_0 = arith.constant 0 : i32
    %c0_i32_1 = arith.constant 0 : i32
    return %arg0, %c0_i32, %c0_i32_0 : i32, i32, i32
  }
  func.func @transform_7(%arg0: i32, %arg1: i32) -> (i32, i32, i32) {
    %c0_i32 = arith.constant 0 : i32
    %c0_i32_0 = arith.constant 0 : i32
    %c0_i32_1 = arith.constant 0 : i32
    return %arg0, %c0_i32, %c0_i32_0 : i32, i32, i32
  }
  func.func @transform_8(%arg0: i32, %arg1: i32) -> (i32, i32, i32) {
    %c0_i32 = arith.constant 0 : i32
    %c0_i32_0 = arith.constant 0 : i32
    %c0_i32_1 = arith.constant 0 : i32
    return %arg0, %c0_i32, %c0_i32_0 : i32, i32, i32
  }
}

</mosaic_0001>

<llo_original>
// kernel: tpu_custom_call.1
$region0: #{tpu_custom_call.1}
  #allocation0 [shape = 'u32[]', space=smem, size = 0x4, offset = 0x4, fixed_abs, tag = 'smem constant byte address 0x4 - core index']
  #allocation1 [shape = 'u32[144,128]{1,0:T(1,128)}', space=vmem, size = 0x12000, scoped, tag = 'internal scratch']
  %s0 = inlined_call_operand.hbm [shape: bf16[2,256,32], index: 0, kind: input, shape index: {}]
  %s1 = inlined_call_operand.hbm [shape: bf16[2,32,256], index: 1, kind: input, shape index: {}]
  %s2 = inlined_call_operand.hbm [shape: f32[2,256,1], index: 2, kind: output, shape index: {0}]
  %s3 = inlined_call_operand.hbm [shape: f32[2,256,1], index: 3, kind: output, shape index: {1}]
  %s4 = inlined_call_operand.hbm [shape: s32[2,256,1], index: 4, kind: output, shape index: {2}]
  %s5 = inlined_call_operand.hbm [shape: f32[2,1,256], index: 5, kind: output, shape index: {3}]
  %s6 = inlined_call_operand.hbm [shape: f32[2,1,256], index: 6, kind: output, shape index: {4}]
  %s7 = inlined_call_operand.hbm [shape: f32[2,1,256], index: 7, kind: output, shape index: {5}]
  %s8 = inlined_call_operand.hbm [shape: s32[2,1,256], index: 8, kind: output, shape index: {6}]
  %9 = xla_tuple %s2, %s3, %s4, %s5, %s6, %s7, %s8
  %s10 = sld [smem:[#allocation0]]
  $region109: #{tpu_custom_call.1} parent=0
    _
  %s12 = ssub.s32 1, %s10
  %s13 = scalar_select 0, %s12, %s10
  $region1: #{tpu_custom_call.1} parent=0
    #allocation2 [shape = 'u8[65536]{0}', space=vmem, size = 0x10000, scoped, tag = 'input window, operand 0']
    #allocation3 [shape = 's32[2]{0}', space=sflag, size = 0x8, scoped, tag = 'scoped memory for tpu_custom_call.1']
    #allocation4 [shape = 's32[2]{0}', space=sflag, size = 0x8, scoped, tag = 'scoped memory for tpu_custom_call.1']
    #allocation5 [shape = 'u8[32768]{0}', space=vmem, size = 0x8000, scoped, tag = 'input window, operand 1']
    #allocation6 [shape = 's32[2]{0}', space=sflag, size = 0x8, scoped, tag = 'scoped memory for tpu_custom_call.1']
    #allocation7 [shape = 'u8[131072]{0}', space=vmem, size = 0x20000, scoped, tag = 'output window, operand 0']
    #allocation8 [shape = 'u8[131072]{0}', space=vmem, size = 0x20000, scoped, tag = 'output window, operand 1']
    #allocation9 [shape = 's32[2]{0}', space=sflag, size = 0x8, scoped, tag = 'scoped memory for tpu_custom_call.1']
    #allocation10 [shape = 'u8[131072]{0}', space=vmem, size = 0x20000, scoped, tag = 'output window, operand 2']
    #allocation11 [shape = 'u8[2048]{0}', space=vmem, size = 0x800, scoped, tag = 'output window, operand 3']
    #allocation12 [shape = 's32[2]{0}', space=sflag, size = 0x8, scoped, tag = 'scoped memory for tpu_custom_call.1']
    #allocation13 [shape = 'u8[2048]{0}', space=vmem, size = 0x800, scoped, tag = 'output window, operand 4']
    #allocation14 [shape = 'u8[2048]{0}', space=vmem, size = 0x800, scoped, tag = 'output window, operand 5']
    #allocation15 [shape = 's32[2]{0}', space=sflag, size = 0x8, scoped, tag = 'scoped memory for tpu_custom_call.1']
    #allocation16 [shape = 'u8[2048]{0}', space=vmem, size = 0x800, scoped, tag = 'output window, operand 6']
    %14 = vsyncpa [#allocation3], 0
    %s15 = scalar_lea.sflag [#allocation3], 1
    %16 = vsyncpa %s15, 0
    %17 = vsyncpa [#allocation6], 0
    %s18 = scalar_lea.sflag [#allocation6], 1
    %19 = vsyncpa %s18, 0
    %20 = vsyncpa [#allocation4], 0
    %s21 = scalar_lea.sflag [#allocation4], 1
    %22 = vsyncpa %s21, 0
    %23 = vsyncpa [#allocation9], 0
    %s24 = scalar_lea.sflag [#allocation9], 1
    %25 = vsyncpa %s24, 0
    %26 = vsyncpa [#allocation12], 0
    %s27 = scalar_lea.sflag [#allocation12], 1
    %28 = vsyncpa %s27, 0
    %29 = vsyncpa [#allocation15], 0
    %s30 = scalar_lea.sflag [#allocation15], 1
    %31 = vsyncpa %s30, 0
    loop: start=0, step=1, limit=6
    $region2: #{tpu_custom_call.1} parent=1 // loop_pre_header
      _
    $region3: #{tpu_custom_call.1} parent=1 // loop_header
      %s33 = sphi 0, %s37
      %p34 = scmp.ge.s32.totalorder %s33, 6
      %s40 = sphi 0, %s52
      %s41 = sphi 0, %s48
      %s42 = sphi 0, %s40
      %s43 = sphi 0, %s41
      %s44 = sphi 0, %s42
      %s45 = sphi 0, %s43
      %s57 = sphi 0, %s59
      %s60 = sphi 0, %s57
      %s61 = sphi 0, %s60
      %s77 = sphi 0, %s61
      %s83 = sphi 0, %s85
      %s86 = sphi 0, %s83
      %s87 = sphi 0, %s86
      %s103 = sphi 0, %s87
      %s111 = sphi 0, %s113
      %s114 = sphi 0, %s111
      %s115 = sphi 0, %s114
      %s131 = sphi 0, %s115
      %s139 = sphi 0, %s141
      %s142 = sphi 0, %s139
      %s143 = sphi 0, %s142
      %s159 = sphi 0, %s143
      %s167 = sphi 0, %s169
      %s170 = sphi 0, %s167
      %s171 = sphi 0, %s170
      %s187 = sphi 0, %s171
      %s193 = sphi 0, %s195
      %s196 = sphi 0, %s193
      %s197 = sphi 0, %s196
      %s213 = sphi 0, %s197
      %s219 = sphi 0, %s221
      %s222 = sphi 0, %s219
      %s223 = sphi 0, %s222
      %s239 = sphi 0, %s223
      %s245 = sphi 0, %s247
      %s248 = sphi 0, %s245
      %s249 = sphi 0, %s248
      %s265 = sphi 0, %s249
      %s271 = sphi 0, %s273
      %s274 = sphi 0, %s271
      %s275 = sphi 0, %s274
      %s291 = sphi 0, %s275
    $region4: #{tpu_custom_call.1} parent=1 // loop_header_branch
      %36 = sbr.rel (%p34) target = $region8
    $region5: #{tpu_custom_call.1} parent=1 // loop_body
      %s38 = ssub.s32 %s33, 1
      %s39 = ssub.s32 %s33, 2
      %s46 = sadd.s32 1, %s41
      %p47 = scmp.ge.s32.totalorder %s46, 2
      %s48 = scalar_select %p47, 0, %s46
      %s49 = sadd.s32 1, %s40
      %s50 = scalar_select %p47, %s49, %s40
      %p51 = scmp.ge.s32.totalorder %s50, 2
      %s52 = scalar_select %p51, 0, %s50
      %s53 = ssub.s32 %s40, %s52
      %s54 = ssub.s32 %s41, %s48
      %s55 = sor.u32 %s53, %s54
      %p56 = scmp.eq.s32.totalorder %s55, 0
      %s58 = sadd.s32 %s57, 1
      %s59 = scalar_select %p56, %s57, %s58
      %p62 = pneg %p56
      %p63 = scmp.eq.s32.totalorder %s33, 3
      %p64 = por %p62, %p63
      %p65 = scmp.ne.s32.totalorder %s57, %s60
      %p66 = scmp.eq.s32.totalorder %s33, 0
      %p67 = por %p65, %p66
      %p68 = scmp.ne.s32.totalorder %s57, %s60
      %p69 = scmp.eq.s32.totalorder %s38, 3
      %p70 = por %p68, %p69
      %p71 = scmp.ne.s32.totalorder %s60, %s61
      %p72 = scmp.eq.s32.totalorder %s38, 0
      %p73 = por %p71, %p72
      %p74 = scmp.ne.s32.totalorder %s60, %s61
      %p75 = scmp.eq.s32.totalorder %s39, 3
      %p76 = por %p74, %p75
      %p78 = scmp.ne.s32.totalorder %s61, %s77
      %p79 = scmp.eq.s32.totalorder %s39, 0
      %p80 = por %p78, %p79
      %s81 = ssub.s32 %s40, %s52
      %p82 = scmp.eq.s32.totalorder %s81, 0
      %s84 = sadd.s32 %s83, 1
      %s85 = scalar_select %p82, %s83, %s84
      %p88 = pneg %p82
      %p89 = scmp.eq.s32.totalorder %s33, 3
      %p90 = por %p88, %p89
      %p91 = scmp.ne.s32.totalorder %s83, %s86
      %p92 = scmp.eq.s32.totalorder %s33, 0
      %p93 = por %p91, %p92
      %p94 = scmp.ne.s32.totalorder %s83, %s86
      %p95 = scmp.eq.s32.totalorder %s38, 3
      %p96 = por %p94, %p95
      %p97 = scmp.ne.s32.totalorder %s86, %s87
      %p98 = scmp.eq.s32.totalorder %s38, 0
      %p99 = por %p97, %p98
      %p100 = scmp.ne.s32.totalorder %s86, %s87
      %p101 = scmp.eq.s32.totalorder %s39, 3
      %p102 = por %p100, %p101
      %p104 = scmp.ne.s32.totalorder %s87, %s103
      %p105 = scmp.eq.s32.totalorder %s39, 0
      %p106 = por %p104, %p105
      %s107 = ssub.s32 %s40, %s52
      %s108 = ssub.s32 %s41, %s48
      %s109 = sor.u32 %s107, %s108
      %p110 = scmp.eq.s32.totalorder %s109, 0
      %s112 = sadd.s32 %s111, 1
      %s113 = scalar_select %p110, %s111, %s112
      %p116 = pneg %p110
      %p117 = scmp.eq.s32.totalorder %s33, 3
      %p118 = por %p116, %p117
      %p119 = scmp.ne.s32.totalorder %s111, %s114
      %p120 = scmp.eq.s32.totalorder %s33, 0
      %p121 = por %p119, %p120
      %p122 = scmp.ne.s32.totalorder %s111, %s114
      %p123 = scmp.eq.s32.totalorder %s38, 3
      %p124 = por %p122, %p123
      %p125 = scmp.ne.s32.totalorder %s114, %s115
      %p126 = scmp.eq.s32.totalorder %s38, 0
      %p127 = por %p125, %p126
      %p128 = scmp.ne.s32.totalorder %s114, %s115
      %p129 = scmp.eq.s32.totalorder %s39, 3
      %p130 = por %p128, %p129
      %p132 = scmp.ne.s32.totalorder %s115, %s131
      %p133 = scmp.eq.s32.totalorder %s39, 0
      %p134 = por %p132, %p133
      %s135 = ssub.s32 %s40, %s52
      %s136 = ssub.s32 %s41, %s48
      %s137 = sor.u32 %s135, %s136
      %p138 = scmp.eq.s32.totalorder %s137, 0
      %s140 = sadd.s32 %s139, 1
      %s141 = scalar_select %p138, %s139, %s140
      %p144 = pneg %p138
      %p145 = scmp.eq.s32.totalorder %s33, 3
      %p146 = por %p144, %p145
      %p147 = scmp.ne.s32.totalorder %s139, %s142
      %p148 = scmp.eq.s32.totalorder %s33, 0
      %p149 = por %p147, %p148
      %p150 = scmp.ne.s32.totalorder %s139, %s142
      %p151 = scmp.eq.s32.totalorder %s38, 3
      %p152 = por %p150, %p151
      %p153 = scmp.ne.s32.totalorder %s142, %s143
      %p154 = scmp.eq.s32.totalorder %s38, 0
      %p155 = por %p153, %p154
      %p156 = scmp.ne.s32.totalorder %s142, %s143
      %p157 = scmp.eq.s32.totalorder %s39, 3
      %p158 = por %p156, %p157
      %p160 = scmp.ne.s32.totalorder %s143, %s159
      %p161 = scmp.eq.s32.totalorder %s39, 0
      %p162 = por %p160, %p161
      %s163 = ssub.s32 %s40, %s52
      %s164 = ssub.s32 %s41, %s48
      %s165 = sor.u32 %s163, %s164
      %p166 = scmp.eq.s32.totalorder %s165, 0
      %s168 = sadd.s32 %s167, 1
      %s169 = scalar_select %p166, %s167, %s168
      %p172 = pneg %p166
      %p173 = scmp.eq.s32.totalorder %s33, 3
      %p174 = por %p172, %p173
      %p175 = scmp.ne.s32.totalorder %s167, %s170
      %p176 = scmp.eq.s32.totalorder %s33, 0
      %p177 = por %p175, %p176
      %p178 = scmp.ne.s32.totalorder %s167, %s170
      %p179 = scmp.eq.s32.totalorder %s38, 3
      %p180 = por %p178, %p179
      %p181 = scmp.ne.s32.totalorder %s170, %s171
      %p182 = scmp.eq.s32.totalorder %s38, 0
      %p183 = por %p181, %p182
      %p184 = scmp.ne.s32.totalorder %s170, %s171
      %p185 = scmp.eq.s32.totalorder %s39, 3
      %p186 = por %p184, %p185
      %p188 = scmp.ne.s32.totalorder %s171, %s187
      %p189 = scmp.eq.s32.totalorder %s39, 0
      %p190 = por %p188, %p189
      %s191 = ssub.s32 %s40, %s52
      %p192 = scmp.eq.s32.totalorder %s191, 0
      %s194 = sadd.s32 %s193, 1
      %s195 = scalar_select %p192, %s193, %s194
      %p198 = pneg %p192
      %p199 = scmp.eq.s32.totalorder %s33, 3
      %p200 = por %p198, %p199
      %p201 = scmp.ne.s32.totalorder %s193, %s196
      %p202 = scmp.eq.s32.totalorder %s33, 0
      %p203 = por %p201, %p202
      %p204 = scmp.ne.s32.totalorder %s193, %s196
      %p205 = scmp.eq.s32.totalorder %s38, 3
      %p206 = por %p204, %p205
      %p207 = scmp.ne.s32.totalorder %s196, %s197
      %p208 = scmp.eq.s32.totalorder %s38, 0
      %p209 = por %p207, %p208
      %p210 = scmp.ne.s32.totalorder %s196, %s197
      %p211 = scmp.eq.s32.totalorder %s39, 3
      %p212 = por %p210, %p211
      %p214 = scmp.ne.s32.totalorder %s197, %s213
      %p215 = scmp.eq.s32.totalorder %s39, 0
      %p216 = por %p214, %p215
      %s217 = ssub.s32 %s40, %s52
      %p218 = scmp.eq.s32.totalorder %s217, 0
      %s220 = sadd.s32 %s219, 1
      %s221 = scalar_select %p218, %s219, %s220
      %p224 = pneg %p218
      %p225 = scmp.eq.s32.totalorder %s33, 3
      %p226 = por %p224, %p225
      %p227 = scmp.ne.s32.totalorder %s219, %s222
      %p228 = scmp.eq.s32.totalorder %s33, 0
      %p229 = por %p227, %p228
      %p230 = scmp.ne.s32.totalorder %s219, %s222
      %p231 = scmp.eq.s32.totalorder %s38, 3
      %p232 = por %p230, %p231
      %p233 = scmp.ne.s32.totalorder %s222, %s223
      %p234 = scmp.eq.s32.totalorder %s38, 0
      %p235 = por %p233, %p234
      %p236 = scmp.ne.s32.totalorder %s222, %s223
      %p237 = scmp.eq.s32.totalorder %s39, 3
      %p238 = por %p236, %p237
      %p240 = scmp.ne.s32.totalorder %s223, %s239
      %p241 = scmp.eq.s32.totalorder %s39, 0
      %p242 = por %p240, %p241
      %s243 = ssub.s32 %s40, %s52
      %p244 = scmp.eq.s32.totalorder %s243, 0
      %s246 = sadd.s32 %s245, 1
      %s247 = scalar_select %p244, %s245, %s246
      %p250 = pneg %p244
      %p251 = scmp.eq.s32.totalorder %s33, 3
      %p252 = por %p250, %p251
      %p253 = scmp.ne.s32.totalorder %s245, %s248
      %p254 = scmp.eq.s32.totalorder %s33, 0
      %p255 = por %p253, %p254
      %p256 = scmp.ne.s32.totalorder %s245, %s248
      %p257 = scmp.eq.s32.totalorder %s38, 3
      %p258 = por %p256, %p257
      %p259 = scmp.ne.s32.totalorder %s248, %s249
      %p260 = scmp.eq.s32.totalorder %s38, 0
      %p261 = por %p259, %p260
      %p262 = scmp.ne.s32.totalorder %s248, %s249
      %p263 = scmp.eq.s32.totalorder %s39, 3
      %p264 = por %p262, %p263
      %p266 = scmp.ne.s32.totalorder %s249, %s265
      %p267 = scmp.eq.s32.totalorder %s39, 0
      %p268 = por %p266, %p267
      %s269 = ssub.s32 %s40, %s52
      %p270 = scmp.eq.s32.totalorder %s269, 0
      %s272 = sadd.s32 %s271, 1
      %s273 = scalar_select %p270, %s271, %s272
      %p276 = pneg %p270
      %p277 = scmp.eq.s32.totalorder %s33, 3
      %p278 = por %p276, %p277
      %p279 = scmp.ne.s32.totalorder %s271, %s274
      %p280 = scmp.eq.s32.totalorder %s33, 0
      %p281 = por %p279, %p280
      %p282 = scmp.ne.s32.totalorder %s271, %s274
      %p283 = scmp.eq.s32.totalorder %s38, 3
      %p284 = por %p282, %p283
      %p285 = scmp.ne.s32.totalorder %s274, %s275
      %p286 = scmp.eq.s32.totalorder %s38, 0
      %p287 = por %p285, %p286
      %p288 = scmp.ne.s32.totalorder %s274, %s275
      %p289 = scmp.eq.s32.totalorder %s39, 3
      %p290 = por %p288, %p289
      %p292 = scmp.ne.s32.totalorder %s275, %s291
      %p293 = scmp.eq.s32.totalorder %s39, 0
      %p294 = por %p292, %p293
      %p295 = scmp.le.s32.totalorder 1, %s33
      %p296 = scmp.lt.s32.totalorder %s33, 5
      %p297 = pnand %p295, %p296
      %p298 = pneg %p297
      // Predicated region
      $region9: #{tpu_custom_call.1} parent=5 // pred_check
        _
      $region10: #{tpu_custom_call.1} parent=5 // pred_check_branch
        %300 = sbr.rel (%p297) target = $region12
      $region11: #{tpu_custom_call.1} parent=5 // pred_region
        %s301 = ssub.s32 %s33, 1
      $region12: #{tpu_custom_call.1} parent=5 // pred_fallthru
        _
      %p302 = scmp.lt.s32.totalorder %s33, 4
      // Predicated region
      $region13: #{tpu_custom_call.1} parent=5 // pred_check
        %p303 = pneg %p302
      $region14: #{tpu_custom_call.1} parent=5 // pred_check_branch
        %305 = sbr.rel (%p303) target = $region16
      $region15: #{tpu_custom_call.1} parent=5 // pred_region
        // Predicated region
        $region17: #{tpu_custom_call.1} parent=15 // pred_check
          %p306 = pneg %p67
        $region18: #{tpu_custom_call.1} parent=15 // pred_check_branch
          %308 = sbr.rel (%p306) target = $region20
        $region19: #{tpu_custom_call.1} parent=15 // pred_region
          %s309 = sand.u32 %s57, 1
          %s310 = scalar_lea.sflag [#allocation3], %s309
          %s311 = sand.u32 %s57, 1
          %s312 = smul.addr %s311, 64
          %s313 = scalar_lea.vmem [#allocation2], %s312
          %s314 = smul.u32 16, %s41
          %s316 = ssub.s32 1024, 1024
          %317 = vsyncadd %s310, %s316
          %s318 = smul.addr %s40, 32
          %s319 = sadd.s32 %s314, %s318
          %s320 = smul.addr %s319, 64
          %s321 = scalar_lea.hbm %s0, %s320
          %s322 = sshll.u32 %s313, 4
          %s323 = int_to_ptr.vmem [resolvable:$true] %s322
          %328 = dma.hbm_to_vmem [thread:$0]  %s321, 1024, %s323, %s310, 64, 64, 4
        $region20: #{tpu_custom_call.1} parent=15 // pred_fallthru
          _
        // Predicated region
        $region21: #{tpu_custom_call.1} parent=15 // pred_check
          %p329 = pneg %p93
        $region22: #{tpu_custom_call.1} parent=15 // pred_check_branch
          %331 = sbr.rel (%p329) target = $region24
        $region23: #{tpu_custom_call.1} parent=15 // pred_region
          %s332 = sand.u32 %s83, 1
          %s333 = scalar_lea.sflag [#allocation6], %s332
          %s334 = sand.u32 %s83, 1
          %s335 = smul.addr %s334, 32
          %s336 = scalar_lea.vmem [#allocation5], %s335
          %s338 = ssub.s32 512, 512
          %339 = vsyncadd %s333, %s338
          %s340 = smul.addr %s40, 8
          %s341 = smul.addr %s340, 64
          %s342 = scalar_lea.hbm %s1, %s341
          %s343 = sshll.u32 %s336, 4
          %s344 = int_to_ptr.vmem [resolvable:$true] %s343
          %349 = dma.hbm_to_vmem [thread:$0]  %s342, 512, %s344, %s333, 128, 128, 8
        $region24: #{tpu_custom_call.1} parent=15 // pred_fallthru
          _
      $region16: #{tpu_custom_call.1} parent=5 // pred_fallthru
        _
      %p350 = scmp.le.s32.totalorder 1, %s33
      %p351 = scmp.lt.s32.totalorder %s33, 5
      %p352 = pnand %p350, %p351
      %p353 = pneg %p352
      // Predicated region
      $region25: #{tpu_custom_call.1} parent=5 // pred_check
        _
      $region26: #{tpu_custom_call.1} parent=5 // pred_check_branch
        %355 = sbr.rel (%p352) target = $region28
      $region27: #{tpu_custom_call.1} parent=5 // pred_region
        %s356 = ssub.s32 %s33, 1
        %s357 = sand.u32 %s60, 1
        %s358 = scalar_lea.sflag [#allocation3], %s357
        %s359 = sand.u32 %s60, 1
        %s360 = smul.addr %s359, 64
        %s361 = scalar_lea.vmem [#allocation2], %s360
        // Predicated region
        $region29: #{tpu_custom_call.1} parent=27 // pred_check
          %p362 = pneg %p73
        $region30: #{tpu_custom_call.1} parent=27 // pred_check_branch
          %364 = sbr.rel (%p362) target = $region32
        $region31: #{tpu_custom_call.1} parent=27 // pred_region
          %365 = dma.done %s358, 1024
        $region32: #{tpu_custom_call.1} parent=27 // pred_fallthru
          _
        %s366 = sand.u32 %s86, 1
        %s367 = scalar_lea.sflag [#allocation6], %s366
        %s368 = sand.u32 %s86, 1
        %s369 = smul.addr %s368, 32
        %s370 = scalar_lea.vmem [#allocation5], %s369
        // Predicated region
        $region33: #{tpu_custom_call.1} parent=27 // pred_check
          %p371 = pneg %p99
        $region34: #{tpu_custom_call.1} parent=27 // pred_check_branch
          %373 = sbr.rel (%p371) target = $region36
        $region35: #{tpu_custom_call.1} parent=27 // pred_region
          %374 = dma.done %s367, 512
        $region36: #{tpu_custom_call.1} parent=27 // pred_fallthru
          _
        %s375 = sand.u32 %s60, 1
        %s376 = scalar_lea.sflag [#allocation3], %s375
        %s377 = sand.u32 %s60, 1
        %s378 = smul.addr %s377, 64
        %s379 = scalar_lea.vmem [#allocation2], %s378
        %p380 = pneg %p73
        %p381 = pneg %p70
        %s382 = sand.u32 %s86, 1
        %s383 = scalar_lea.sflag [#allocation6], %s382
        %s384 = sand.u32 %s86, 1
        %s385 = smul.addr %s384, 32
        %s386 = scalar_lea.vmem [#allocation5], %s385
        %p387 = pneg %p99
        %p388 = pneg %p96
        %p389 = pneg %p127
        %p390 = pneg %p124
        %s391 = sand.u32 %s114, 1
        %s392 = scalar_lea.sflag [#allocation4], %s391
        %s393 = sand.u32 %s114, 1
        %s394 = smul.addr %s393, 128
        %s395 = scalar_lea.vmem [#allocation7], %s394
        %p396 = pneg %p155
        %p397 = pneg %p152
        %s398 = sand.u32 %s38, 1
        %s399 = scalar_lea.sflag [#allocation9], %s398
        %s400 = sand.u32 %s142, 1
        %s401 = smul.addr %s400, 128
        %s402 = scalar_lea.vmem [#allocation8], %s401
        %p403 = pneg %p183
        %p404 = pneg %p180
        %s405 = sand.u32 %s38, 1
        %s406 = scalar_lea.sflag [#allocation9], %s405
        %s407 = sand.u32 %s170, 1
        %s408 = smul.addr %s407, 128
        %s409 = scalar_lea.vmem [#allocation10], %s408
        %p410 = pneg %p209
        %p411 = pneg %p206
        %s412 = sand.u32 %s38, 1
        %s413 = scalar_lea.sflag [#allocation12], %s412
        %s414 = sand.u32 %s196, 1
        %s415 = smul.addr %s414, 2
        %s416 = scalar_lea.vmem [#allocation11], %s415
        %p417 = pneg %p235
        %p418 = pneg %p232
        %s419 = sand.u32 %s38, 1
        %s420 = scalar_lea.sflag [#allocation12], %s419
        %s421 = sand.u32 %s222, 1
        %s422 = smul.addr %s421, 2
        %s423 = scalar_lea.vmem [#allocation13], %s422
        %p424 = pneg %p261
        %p425 = pneg %p258
        %s426 = sand.u32 %s38, 1
        %s427 = scalar_lea.sflag [#allocation15], %s426
        %s428 = sand.u32 %s248, 1
        %s429 = smul.addr %s428, 2
        %s430 = scalar_lea.vmem [#allocation14], %s429
        %p431 = pneg %p287
        %p432 = pneg %p284
        %s433 = sand.u32 %s38, 1
        %s434 = scalar_lea.sflag [#allocation15], %s433
        %s435 = sand.u32 %s274, 1
        %s436 = smul.addr %s435, 2
        %s437 = scalar_lea.vmem [#allocation16], %s436
        %s438 = smul.u32 16, %s43
        %s439 = smul.u32 16, %s43
        %s440 = smul.u32 16, %s43
        %s441 = smul.u32 16, %s43
        %v443 = vld [vmem:[%s361] sm:$0xf]
        %v444 = vld [vmem:[%s361 + $0x4] sm:$0xf]
        %v445 = vld [vmem:[%s361 + $0x8] sm:$0xf]
        %v446 = vld [vmem:[%s361 + $0xc] sm:$0xf]
        %v447 = vld [vmem:[%s361 + $0x10] sm:$0xf]
        %v448 = vld [vmem:[%s361 + $0x14] sm:$0xf]
        %v449 = vld [vmem:[%s361 + $0x18] sm:$0xf]
        %v450 = vld [vmem:[%s361 + $0x1c] sm:$0xf]
        %v451 = vld [vmem:[%s361 + $0x20] sm:$0xf]
        %v452 = vld [vmem:[%s361 + $0x24] sm:$0xf]
        %v453 = vld [vmem:[%s361 + $0x28] sm:$0xf]
        %v454 = vld [vmem:[%s361 + $0x2c] sm:$0xf]
        %v455 = vld [vmem:[%s361 + $0x30] sm:$0xf]
        %v456 = vld [vmem:[%s361 + $0x34] sm:$0xf]
        %v457 = vld [vmem:[%s361 + $0x38] sm:$0xf]
        %v458 = vld [vmem:[%s361 + $0x3c] sm:$0xf]
        %v459 = vld [vmem:[%s370] sm:$0xff]
        %v460 = vld [vmem:[%s370 + $0x8] sm:$0xff]
        %v461 = vld [vmem:[%s370 + $0x10] sm:$0xff]
        %v462 = vld [vmem:[%s370 + $0x18] sm:$0xff]
        %v479 = vunpack.c.l.b16 %v443
        %v480 = vunpack.c.l.b16 %v444
        %v481 = vunpack.c.l.b16 %v445
        %v482 = vunpack.c.l.b16 %v446
        %v483 = vunpack.c.l.b16 %v447
        %v484 = vunpack.c.l.b16 %v448
        %v485 = vunpack.c.l.b16 %v449
        %v486 = vunpack.c.l.b16 %v450
        %v487 = vunpack.c.l.b16 %v451
        %v488 = vunpack.c.l.b16 %v452
        %v489 = vunpack.c.l.b16 %v453
        %v490 = vunpack.c.l.b16 %v454
        %v491 = vunpack.c.l.b16 %v455
        %v492 = vunpack.c.l.b16 %v456
        %v493 = vunpack.c.l.b16 %v457
        %v494 = vunpack.c.l.b16 %v458
        %v495 = vpack.c.b16 %v480, %v479
        %v496 = vpack.c.b16 %v482, %v481
        %v497 = vpack.c.b16 %v484, %v483
        %v498 = vpack.c.b16 %v486, %v485
        %v499 = vpack.c.b16 %v488, %v487
        %v500 = vpack.c.b16 %v490, %v489
        %v501 = vpack.c.b16 %v492, %v491
        %v502 = vpack.c.b16 %v494, %v493
        %v507 = vunpack.c.l.b16 %v459
        %v508 = vunpack.c.h.b16 %v459
        %v509 = vunpack.c.l.b16 %v460
        %v510 = vunpack.c.h.b16 %v460
        %v511 = vunpack.c.l.b16 %v461
        %v512 = vunpack.c.h.b16 %v461
        %v513 = vunpack.c.l.b16 %v462
        %v514 = vunpack.c.h.b16 %v462
        %v515 = vpack.c.b16 %v509, %v507
        %v516 = vpack.c.b16 %v510, %v508
        %v517 = vpack.c.b16 %v513, %v511
        %v518 = vpack.c.b16 %v514, %v512
        %vm523 = vcmask 261120
        %v525 = vsel %vm523, %v495, 0
        %v528 = vsel %vm523, %v496, 0
        %v531 = vsel %vm523, %v497, 0
        %v534 = vsel %vm523, %v498, 0
        %v537 = vsel %vm523, %v499, 0
        %v540 = vsel %vm523, %v500, 0
        %v543 = vsel %vm523, %v501, 0
        %v546 = vsel %vm523, %v502, 0
        %548 = vmatprep.subr.bf16.mxu0 %v516
        %549 = vmatpush1.bf16.msra.mxu0 %v515
        %550 = vmatprep.subr.bf16.mxu0 %v518
        %551 = vmatpush1.bf16.msra.mxu0 %v517
        %552 = vmatprep.subr.bf16.mxu0 0
        %553 = vmatpush1.bf16.msra.mxu0 0
        %554 = vmatprep.subr.bf16.mxu0 0
        %555 = vmatpush1.bf16.msra.mxu0 0
        %556 = vmatprep.subr.bf16.mxu0 0
        %557 = vmatpush1.bf16.msra.mxu0 0
        %558 = vmatprep.subr.bf16.mxu0 0
        %559 = vmatpush1.bf16.msra.mxu0 0
        %560 = vmatprep.subr.bf16.mxu0 0
        %561 = vmatpush1.bf16.msra.mxu0 0
        %562 = vmatprep.subr.bf16.mxu0 0
        %563 = vmatpush1.bf16.msra.mxu0 0
        %564 = vmatprep.subr.bf16.mxu0 0
        %565 = vmatpush1.bf16.msra.mxu0 0
        %566 = vmatprep.subr.bf16.mxu0 0
        %567 = vmatpush1.bf16.msra.mxu0 0
        %568 = vmatprep.subr.bf16.mxu0 0
        %569 = vmatpush1.bf16.msra.mxu0 0
        %570 = vmatprep.subr.bf16.mxu0 0
        %571 = vmatpush1.bf16.msra.mxu0 0
        %572 = vmatprep.subr.bf16.mxu0 0
        %573 = vmatpush1.bf16.msra.mxu0 0
        %574 = vmatprep.subr.bf16.mxu0 0
        %575 = vmatpush1.bf16.msra.mxu0 0
        %576 = vmatprep.subr.bf16.mxu0 0
        %577 = vmatpush1.bf16.msra.mxu0 0
        %578 = vmatprep.subr.bf16.mxu0 0
        %579 = vmatpush1.bf16.msra.mxu0 0
        %580 = vmatprep.mubr.bf16.mxu0 0
        %581 = vmatmul.mubr.bf16.gmra.mrb[0].mxu0 %v525
        %v582 = vpop.f32.mrb[0].mxu0
        %v583 = vadd.f32 0.0, %v582
        %v584 = vpop.f32.mrb[0].mxu0
        %v585 = vadd.f32 0.0, %v584
        %v586 = vpop.f32.mrb[0].mxu0
        %v587 = vadd.f32 0.0, %v586
        %v588 = vpop.f32.mrb[0].mxu0
        %v589 = vadd.f32 0.0, %v588
        %590 = vmatprep.mubr.bf16.mxu0 0
        %591 = vmatmul.mubr.bf16.gmra.mrb[0].mxu0 %v528
        %v592 = vpop.f32.mrb[0].mxu0
        %v593 = vadd.f32 0.0, %v592
        %v594 = vpop.f32.mrb[0].mxu0
        %v595 = vadd.f32 0.0, %v594
        %v596 = vpop.f32.mrb[0].mxu0
        %v597 = vadd.f32 0.0, %v596
        %v598 = vpop.f32.mrb[0].mxu0
        %v599 = vadd.f32 0.0, %v598
        %600 = vmatprep.mubr.bf16.mxu0 0
        %601 = vmatmul.mubr.bf16.gmra.mrb[0].mxu0 %v531
        %v602 = vpop.f32.mrb[0].mxu0
        %v603 = vadd.f32 0.0, %v602
        %v604 = vpop.f32.mrb[0].mxu0
        %v605 = vadd.f32 0.0, %v604
        %v606 = vpop.f32.mrb[0].mxu0
        %v607 = vadd.f32 0.0, %v606
        %v608 = vpop.f32.mrb[0].mxu0
        %v609 = vadd.f32 0.0, %v608
        %610 = vmatprep.mubr.bf16.mxu0 0
        %611 = vmatmul.mubr.bf16.gmra.mrb[0].mxu0 %v534
        %v612 = vpop.f32.mrb[0].mxu0
        %v613 = vadd.f32 0.0, %v612
        %v614 = vpop.f32.mrb[0].mxu0
        %v615 = vadd.f32 0.0, %v614
        %v616 = vpop.f32.mrb[0].mxu0
        %v617 = vadd.f32 0.0, %v616
        %v618 = vpop.f32.mrb[0].mxu0
        %v619 = vadd.f32 0.0, %v618
        %620 = vmatprep.mubr.bf16.mxu0 0
        %621 = vmatmul.mubr.bf16.gmra.mrb[0].mxu0 %v537
        %v622 = vpop.f32.mrb[0].mxu0
        %v623 = vadd.f32 0.0, %v622
        %v624 = vpop.f32.mrb[0].mxu0
        %v625 = vadd.f32 0.0, %v624
        %v626 = vpop.f32.mrb[0].mxu0
        %v627 = vadd.f32 0.0, %v626
        %v628 = vpop.f32.mrb[0].mxu0
        %v629 = vadd.f32 0.0, %v628
        %630 = vmatprep.mubr.bf16.mxu0 0
        %631 = vmatmul.mubr.bf16.gmra.mrb[0].mxu0 %v540
        %v632 = vpop.f32.mrb[0].mxu0
        %v633 = vadd.f32 0.0, %v632
        %v634 = vpop.f32.mrb[0].mxu0
        %v635 = vadd.f32 0.0, %v634
        %v636 = vpop.f32.mrb[0].mxu0
        %v637 = vadd.f32 0.0, %v636
        %v638 = vpop.f32.mrb[0].mxu0
        %v639 = vadd.f32 0.0, %v638
        %640 = vmatprep.mubr.bf16.mxu0 0
        %641 = vmatmul.mubr.bf16.gmra.mrb[0].mxu0 %v543
        %v642 = vpop.f32.mrb[0].mxu0
        %v643 = vadd.f32 0.0, %v642
        %v644 = vpop.f32.mrb[0].mxu0
        %v645 = vadd.f32 0.0, %v644
        %v646 = vpop.f32.mrb[0].mxu0
        %v647 = vadd.f32 0.0, %v646
        %v648 = vpop.f32.mrb[0].mxu0
        %v649 = vadd.f32 0.0, %v648
        %650 = vmatprep.mubr.bf16.mxu0 0
        %651 = vmatmul.mubr.bf16.gmra.mrb[0].mxu0 %v546
        %v652 = vpop.f32.mrb[0].mxu0
        %v653 = vadd.f32 0.0, %v652
        %v654 = vpop.f32.mrb[0].mxu0
        %v655 = vadd.f32 0.0, %v654
        %v656 = vpop.f32.mrb[0].mxu0
        %v657 = vadd.f32 0.0, %v656
        %v658 = vpop.f32.mrb[0].mxu0
        %v659 = vadd.f32 0.0, %v658
        %660 = vdwg.mxu0
        %v661 = vmul.f32 %v583, 0.3125
        %v662 = vmul.f32 %v585, 0.3125
        %v663 = vmul.f32 %v587, 0.3125
        %v664 = vmul.f32 %v589, 0.3125
        %v665 = vmul.f32 %v593, 0.3125
        %v666 = vmul.f32 %v595, 0.3125
        %v667 = vmul.f32 %v597, 0.3125
        %v668 = vmul.f32 %v599, 0.3125
        %v669 = vmul.f32 %v603, 0.3125
        %v670 = vmul.f32 %v605, 0.3125
        %v671 = vmul.f32 %v607, 0.3125
        %v672 = vmul.f32 %v609, 0.3125
        %v673 = vmul.f32 %v613, 0.3125
        %v674 = vmul.f32 %v615, 0.3125
        %v675 = vmul.f32 %v617, 0.3125
        %v676 = vmul.f32 %v619, 0.3125
        %v677 = vmul.f32 %v623, 0.3125
        %v678 = vmul.f32 %v625, 0.3125
        %v679 = vmul.f32 %v627, 0.3125
        %v680 = vmul.f32 %v629, 0.3125
        %v681 = vmul.f32 %v633, 0.3125
        %v682 = vmul.f32 %v635, 0.3125
        %v683 = vmul.f32 %v637, 0.3125
        %v684 = vmul.f32 %v639, 0.3125
        %v685 = vmul.f32 %v643, 0.3125
        %v686 = vmul.f32 %v645, 0.3125
        %v687 = vmul.f32 %v647, 0.3125
        %v688 = vmul.f32 %v649, 0.3125
        %v689 = vmul.f32 %v653, 0.3125
        %v690 = vmul.f32 %v655, 0.3125
        %v691 = vmul.f32 %v657, 0.3125
        %v692 = vmul.f32 %v659, 0.3125
        %v693 = vmax.f32 %v661, %v662
        %694 = vmax.xlane.f32.xlu0 %v693
        %v695 = vpop.xlane.xlu0 %694
        %v696 = vmax.f32 %v663, %v664
        %697 = vmax.xlane.f32.xlu0 %v696
        %v698 = vpop.xlane.xlu0 %697
        %v699 = vmax.f32 %v665, %v666
        %700 = vmax.xlane.f32.xlu0 %v699
        %v701 = vpop.xlane.xlu0 %700
        %v702 = vmax.f32 %v667, %v668
        %703 = vmax.xlane.f32.xlu0 %v702
        %v704 = vpop.xlane.xlu0 %703
        %v705 = vmax.f32 %v669, %v670
        %706 = vmax.xlane.f32.xlu0 %v705
        %v707 = vpop.xlane.xlu0 %706
        %v708 = vmax.f32 %v671, %v672
        %709 = vmax.xlane.f32.xlu0 %v708
        %v710 = vpop.xlane.xlu0 %709
        %v711 = vmax.f32 %v673, %v674
        %712 = vmax.xlane.f32.xlu0 %v711
        %v713 = vpop.xlane.xlu0 %712
        %v714 = vmax.f32 %v675, %v676
        %715 = vmax.xlane.f32.xlu0 %v714
        %v716 = vpop.xlane.xlu0 %715
        %v717 = vmax.f32 %v677, %v678
        %718 = vmax.xlane.f32.xlu0 %v717
        %v719 = vpop.xlane.xlu0 %718
        %v720 = vmax.f32 %v679, %v680
        %721 = vmax.xlane.f32.xlu0 %v720
        %v722 = vpop.xlane.xlu0 %721
        %v723 = vmax.f32 %v681, %v682
        %724 = vmax.xlane.f32.xlu0 %v723
        %v725 = vpop.xlane.xlu0 %724
        %v726 = vmax.f32 %v683, %v684
        %727 = vmax.xlane.f32.xlu0 %v726
        %v728 = vpop.xlane.xlu0 %727
        %v729 = vmax.f32 %v685, %v686
        %730 = vmax.xlane.f32.xlu0 %v729
        %v731 = vpop.xlane.xlu0 %730
        %v732 = vmax.f32 %v687, %v688
        %733 = vmax.xlane.f32.xlu0 %v732
        %v734 = vpop.xlane.xlu0 %733
        %v735 = vmax.f32 %v689, %v690
        %736 = vmax.xlane.f32.xlu0 %v735
        %v737 = vpop.xlane.xlu0 %736
        %v738 = vmax.f32 %v691, %v692
        %739 = vmax.xlane.f32.xlu0 %v738
        %v740 = vpop.xlane.xlu0 %739
        %v741 = vsub.f32 %v661, %v695
        %v742 = vsub.f32 %v662, %v695
        %v743 = vsub.f32 %v663, %v698
        %v744 = vsub.f32 %v664, %v698
        %v745 = vsub.f32 %v665, %v701
        %v746 = vsub.f32 %v666, %v701
        %v747 = vsub.f32 %v667, %v704
        %v748 = vsub.f32 %v668, %v704
        %v749 = vsub.f32 %v669, %v707
        %v750 = vsub.f32 %v670, %v707
        %v751 = vsub.f32 %v671, %v710
        %v752 = vsub.f32 %v672, %v710
        %v753 = vsub.f32 %v673, %v713
        %v754 = vsub.f32 %v674, %v713
        %v755 = vsub.f32 %v675, %v716
        %v756 = vsub.f32 %v676, %v716
        %v757 = vsub.f32 %v677, %v719
        %v758 = vsub.f32 %v678, %v719
        %v759 = vsub.f32 %v679, %v722
        %v760 = vsub.f32 %v680, %v722
        %v761 = vsub.f32 %v681, %v725
        %v762 = vsub.f32 %v682, %v725
        %v763 = vsub.f32 %v683, %v728
        %v764 = vsub.f32 %v684, %v728
        %v765 = vsub.f32 %v685, %v731
        %v766 = vsub.f32 %v686, %v731
        %v767 = vsub.f32 %v687, %v734
        %v768 = vsub.f32 %v688, %v734
        %v769 = vsub.f32 %v689, %v737
        %v770 = vsub.f32 %v690, %v737
        %v771 = vsub.f32 %v691, %v740
        %v772 = vsub.f32 %v692, %v740
        %v773 = vmul.f32 %v741, 1.442695
        %v774 = vpow.pop %v773
        %v775 = vmul.f32 %v742, 1.442695
        %v776 = vpow.pop %v775
        %v777 = vmul.f32 %v743, 1.442695
        %v778 = vpow.pop %v777
        %v779 = vmul.f32 %v744, 1.442695
        %v780 = vpow.pop %v779
        %v781 = vmul.f32 %v745, 1.442695
        %v782 = vpow.pop %v781
        %v783 = vmul.f32 %v746, 1.442695
        %v784 = vpow.pop %v783
        %v785 = vmul.f32 %v747, 1.442695
        %v786 = vpow.pop %v785
        %v787 = vmul.f32 %v748, 1.442695
        %v788 = vpow.pop %v787
        %v789 = vmul.f32 %v749, 1.442695
        %v790 = vpow.pop %v789
        %v791 = vmul.f32 %v750, 1.442695
        %v792 = vpow.pop %v791
        %v793 = vmul.f32 %v751, 1.442695
        %v794 = vpow.pop %v793
        %v795 = vmul.f32 %v752, 1.442695
        %v796 = vpow.pop %v795
        %v797 = vmul.f32 %v753, 1.442695
        %v798 = vpow.pop %v797
        %v799 = vmul.f32 %v754, 1.442695
        %v800 = vpow.pop %v799
        %v801 = vmul.f32 %v755, 1.442695
        %v802 = vpow.pop %v801
        %v803 = vmul.f32 %v756, 1.442695
        %v804 = vpow.pop %v803
        %v805 = vmul.f32 %v757, 1.442695
        %v806 = vpow.pop %v805
        %v807 = vmul.f32 %v758, 1.442695
        %v808 = vpow.pop %v807
        %v809 = vmul.f32 %v759, 1.442695
        %v810 = vpow.pop %v809
        %v811 = vmul.f32 %v760, 1.442695
        %v812 = vpow.pop %v811
        %v813 = vmul.f32 %v761, 1.442695
        %v814 = vpow.pop %v813
        %v815 = vmul.f32 %v762, 1.442695
        %v816 = vpow.pop %v815
        %v817 = vmul.f32 %v763, 1.442695
        %v818 = vpow.pop %v817
        %v819 = vmul.f32 %v764, 1.442695
        %v820 = vpow.pop %v819
        %v821 = vmul.f32 %v765, 1.442695
        %v822 = vpow.pop %v821
        %v823 = vmul.f32 %v766, 1.442695
        %v824 = vpow.pop %v823
        %v825 = vmul.f32 %v767, 1.442695
        %v826 = vpow.pop %v825
        %v827 = vmul.f32 %v768, 1.442695
        %v828 = vpow.pop %v827
        %v829 = vmul.f32 %v769, 1.442695
        %v830 = vpow.pop %v829
        %v831 = vmul.f32 %v770, 1.442695
        %v832 = vpow.pop %v831
        %v833 = vmul.f32 %v771, 1.442695
        %v834 = vpow.pop %v833
        %v835 = vmul.f32 %v772, 1.442695
        %v836 = vpow.pop %v835
        %v837 = vadd.f32 %v774, %v776
        %838 = vadd.xlane.f32.xlu0 %v837
        %v839 = vpop.xlane.xlu0 %838
        %v840 = vadd.f32 %v778, %v780
        %841 = vadd.xlane.f32.xlu0 %v840
        %v842 = vpop.xlane.xlu0 %841
        %v843 = vadd.f32 %v782, %v784
        %844 = vadd.xlane.f32.xlu0 %v843
        %v845 = vpop.xlane.xlu0 %844
        %v846 = vadd.f32 %v786, %v788
        %847 = vadd.xlane.f32.xlu0 %v846
        %v848 = vpop.xlane.xlu0 %847
        %v849 = vadd.f32 %v790, %v792
        %850 = vadd.xlane.f32.xlu0 %v849
        %v851 = vpop.xlane.xlu0 %850
        %v852 = vadd.f32 %v794, %v796
        %853 = vadd.xlane.f32.xlu0 %v852
        %v854 = vpop.xlane.xlu0 %853
        %v855 = vadd.f32 %v798, %v800
        %856 = vadd.xlane.f32.xlu0 %v855
        %v857 = vpop.xlane.xlu0 %856
        %v858 = vadd.f32 %v802, %v804
        %859 = vadd.xlane.f32.xlu0 %v858
        %v860 = vpop.xlane.xlu0 %859
        %v861 = vadd.f32 %v806, %v808
        %862 = vadd.xlane.f32.xlu0 %v861
        %v863 = vpop.xlane.xlu0 %862
        %v864 = vadd.f32 %v810, %v812
        %865 = vadd.xlane.f32.xlu0 %v864
        %v866 = vpop.xlane.xlu0 %865
        %v867 = vadd.f32 %v814, %v816
        %868 = vadd.xlane.f32.xlu0 %v867
        %v869 = vpop.xlane.xlu0 %868
        %v870 = vadd.f32 %v818, %v820
        %871 = vadd.xlane.f32.xlu0 %v870
        %v872 = vpop.xlane.xlu0 %871
        %v873 = vadd.f32 %v822, %v824
        %874 = vadd.xlane.f32.xlu0 %v873
        %v875 = vpop.xlane.xlu0 %874
        %v876 = vadd.f32 %v826, %v828
        %877 = vadd.xlane.f32.xlu0 %v876
        %v878 = vpop.xlane.xlu0 %877
        %v879 = vadd.f32 %v830, %v832
        %880 = vadd.xlane.f32.xlu0 %v879
        %v881 = vpop.xlane.xlu0 %880
        %v882 = vadd.f32 %v834, %v836
        %883 = vadd.xlane.f32.xlu0 %v882
        %v884 = vpop.xlane.xlu0 %883
        %v885 = vlaneseq
        %v886 = vand.u32 %v885, 127
        %v887 = vadd.s32 %v886, 128
        %vm888 = vcmask 7168
        %889 = vst.msk [vmem:[%s395] sm:$0xff] %vm888, %v695
        %890 = vst.msk [vmem:[%s395 + $0x8] sm:$0xff] %vm888, %v698
        %891 = vst.msk [vmem:[%s395 + $0x10] sm:$0xff] %vm888, %v701
        %892 = vst.msk [vmem:[%s395 + $0x18] sm:$0xff] %vm888, %v704
        %893 = vst.msk [vmem:[%s395 + $0x20] sm:$0xff] %vm888, %v707
        %894 = vst.msk [vmem:[%s395 + $0x28] sm:$0xff] %vm888, %v710
        %895 = vst.msk [vmem:[%s395 + $0x30] sm:$0xff] %vm888, %v713
        %896 = vst.msk [vmem:[%s395 + $0x38] sm:$0xff] %vm888, %v716
        %897 = vst.msk [vmem:[%s395 + $0x40] sm:$0xff] %vm888, %v719
        %898 = vst.msk [vmem:[%s395 + $0x48] sm:$0xff] %vm888, %v722
        %899 = vst.msk [vmem:[%s395 + $0x50] sm:$0xff] %vm888, %v725
        %900 = vst.msk [vmem:[%s395 + $0x58] sm:$0xff] %vm888, %v728
        %901 = vst.msk [vmem:[%s395 + $0x60] sm:$0xff] %vm888, %v731
        %902 = vst.msk [vmem:[%s395 + $0x68] sm:$0xff] %vm888, %v734
        %903 = vst.msk [vmem:[%s395 + $0x70] sm:$0xff] %vm888, %v737
        %904 = vst.msk [vmem:[%s395 + $0x78] sm:$0xff] %vm888, %v740
        %v905 = vrcp.pop %v839
        %v906 = vmul.f32 1.0, %v905
        %v907 = vrcp.pop %v842
        %v908 = vmul.f32 1.0, %v907
        %v909 = vrcp.pop %v845
        %v910 = vmul.f32 1.0, %v909
        %v911 = vrcp.pop %v848
        %v912 = vmul.f32 1.0, %v911
        %v913 = vrcp.pop %v851
        %v914 = vmul.f32 1.0, %v913
        %v915 = vrcp.pop %v854
        %v916 = vmul.f32 1.0, %v915
        %v917 = vrcp.pop %v857
        %v918 = vmul.f32 1.0, %v917
        %v919 = vrcp.pop %v860
        %v920 = vmul.f32 1.0, %v919
        %v921 = vrcp.pop %v863
        %v922 = vmul.f32 1.0, %v921
        %v923 = vrcp.pop %v866
        %v924 = vmul.f32 1.0, %v923
        %v925 = vrcp.pop %v869
        %v926 = vmul.f32 1.0, %v925
        %v927 = vrcp.pop %v872
        %v928 = vmul.f32 1.0, %v927
        %v929 = vrcp.pop %v875
        %v930 = vmul.f32 1.0, %v929
        %v931 = vrcp.pop %v878
        %v932 = vmul.f32 1.0, %v931
        %v933 = vrcp.pop %v881
        %v934 = vmul.f32 1.0, %v933
        %v935 = vrcp.pop %v884
        %v936 = vmul.f32 1.0, %v935
        %937 = vst.msk [vmem:[%s402] sm:$0xff] %vm888, %v906
        %938 = vst.msk [vmem:[%s402 + $0x8] sm:$0xff] %vm888, %v908
        %939 = vst.msk [vmem:[%s402 + $0x10] sm:$0xff] %vm888, %v910
        %940 = vst.msk [vmem:[%s402 + $0x18] sm:$0xff] %vm888, %v912
        %941 = vst.msk [vmem:[%s402 + $0x20] sm:$0xff] %vm888, %v914
        %942 = vst.msk [vmem:[%s402 + $0x28] sm:$0xff] %vm888, %v916
        %943 = vst.msk [vmem:[%s402 + $0x30] sm:$0xff] %vm888, %v918
        %944 = vst.msk [vmem:[%s402 + $0x38] sm:$0xff] %vm888, %v920
        %945 = vst.msk [vmem:[%s402 + $0x40] sm:$0xff] %vm888, %v922
        %946 = vst.msk [vmem:[%s402 + $0x48] sm:$0xff] %vm888, %v924
        %947 = vst.msk [vmem:[%s402 + $0x50] sm:$0xff] %vm888, %v926
        %948 = vst.msk [vmem:[%s402 + $0x58] sm:$0xff] %vm888, %v928
        %949 = vst.msk [vmem:[%s402 + $0x60] sm:$0xff] %vm888, %v930
        %950 = vst.msk [vmem:[%s402 + $0x68] sm:$0xff] %vm888, %v932
        %951 = vst.msk [vmem:[%s402 + $0x70] sm:$0xff] %vm888, %v934
        %952 = vst.msk [vmem:[%s402 + $0x78] sm:$0xff] %vm888, %v936
        %vm953 = vcmp.eq.f32.partialorder %v661, %v695
        %vm954 = vcmp.eq.f32.partialorder %v662, %v695
        %vm955 = vcmp.eq.f32.partialorder %v663, %v698
        %vm956 = vcmp.eq.f32.partialorder %v664, %v698
        %vm957 = vcmp.eq.f32.partialorder %v665, %v701
        %vm958 = vcmp.eq.f32.partialorder %v666, %v701
        %vm959 = vcmp.eq.f32.partialorder %v667, %v704
        %vm960 = vcmp.eq.f32.partialorder %v668, %v704
        %vm961 = vcmp.eq.f32.partialorder %v669, %v707
        %vm962 = vcmp.eq.f32.partialorder %v670, %v707
        %vm963 = vcmp.eq.f32.partialorder %v671, %v710
        %vm964 = vcmp.eq.f32.partialorder %v672, %v710
        %vm965 = vcmp.eq.f32.partialorder %v673, %v713
        %vm966 = vcmp.eq.f32.partialorder %v674, %v713
        %vm967 = vcmp.eq.f32.partialorder %v675, %v716
        %vm968 = vcmp.eq.f32.partialorder %v676, %v716
        %vm969 = vcmp.eq.f32.partialorder %v677, %v719
        %vm970 = vcmp.eq.f32.partialorder %v678, %v719
        %vm971 = vcmp.eq.f32.partialorder %v679, %v722
        %vm972 = vcmp.eq.f32.partialorder %v680, %v722
        %vm973 = vcmp.eq.f32.partialorder %v681, %v725
        %vm974 = vcmp.eq.f32.partialorder %v682, %v725
        %vm975 = vcmp.eq.f32.partialorder %v683, %v728
        %vm976 = vcmp.eq.f32.partialorder %v684, %v728
        %vm977 = vcmp.eq.f32.partialorder %v685, %v731
        %vm978 = vcmp.eq.f32.partialorder %v686, %v731
        %vm979 = vcmp.eq.f32.partialorder %v687, %v734
        %vm980 = vcmp.eq.f32.partialorder %v688, %v734
        %vm981 = vcmp.eq.f32.partialorder %v689, %v737
        %vm982 = vcmp.eq.f32.partialorder %v690, %v737
        %vm983 = vcmp.eq.f32.partialorder %v691, %v740
        %vm984 = vcmp.eq.f32.partialorder %v692, %v740
        %v985 = vsel %vm953, %v886, 256
        %v986 = vsel %vm954, %v887, 256
        %v987 = vsel %vm955, %v886, 256
        %v988 = vsel %vm956, %v887, 256
        %v989 = vsel %vm957, %v886, 256
        %v990 = vsel %vm958, %v887, 256
        %v991 = vsel %vm959, %v886, 256
        %v992 = vsel %vm960, %v887, 256
        %v993 = vsel %vm961, %v886, 256
        %v994 = vsel %vm962, %v887, 256
        %v995 = vsel %vm963, %v886, 256
        %v996 = vsel %vm964, %v887, 256
        %v997 = vsel %vm965, %v886, 256
        %v998 = vsel %vm966, %v887, 256
        %v999 = vsel %vm967, %v886, 256
        %v1000 = vsel %vm968, %v887, 256
        %v1001 = vsel %vm969, %v886, 256
        %v1002 = vsel %vm970, %v887, 256
        %v1003 = vsel %vm971, %v886, 256
        %v1004 = vsel %vm972, %v887, 256
        %v1005 = vsel %vm973, %v886, 256
        %v1006 = vsel %vm974, %v887, 256
        %v1007 = vsel %vm975, %v886, 256
        %v1008 = vsel %vm976, %v887, 256
        %v1009 = vsel %vm977, %v886, 256
        %v1010 = vsel %vm978, %v887, 256
        %v1011 = vsel %vm979, %v886, 256
        %v1012 = vsel %vm980, %v887, 256
        %v1013 = vsel %vm981, %v886, 256
        %v1014 = vsel %vm982, %v887, 256
        %v1015 = vsel %vm983, %v886, 256
        %v1016 = vsel %vm984, %v887, 256
        %vm1017 = vcmp.lt.s32.totalorder %v985, %v986
        %v1018 = vsel %vm1017, %v985, %v986
        %v1019 = vand.u32 %v1018, 65535
        %v1020 = vshra.s32 %v1018, 16
        %v1021 = vcvt.s32.f32 %v1019
        %v1022 = vcvt.s32.f32 %v1020
        %1023 = vmin.xlane.f32.xlu0 %v1022
        %v1024 = vpop.xlane.xlu0 %1023
        %vm1025 = vcmp.eq.f32.partialorder %v1022, %v1024
        %v1026 = vsel %vm1025, %v1021, inf
        %1027 = vmin.xlane.f32.xlu0 %v1026
        %v1028 = vpop.xlane.xlu0 %1027
        %v1029 = vcvt.f32.s32 %v1028
        %v1030 = vcvt.f32.s32 %v1024
        %v1031 = vshll.u32 %v1030, 16
        %v1032 = vadd.s32 %v1031, %v1029
        %vm1033 = vcmp.lt.s32.totalorder %v987, %v988
        %v1034 = vsel %vm1033, %v987, %v988
        %v1035 = vand.u32 %v1034, 65535
        %v1036 = vshra.s32 %v1034, 16
        %v1037 = vcvt.s32.f32 %v1035
        %v1038 = vcvt.s32.f32 %v1036
        %1039 = vmin.xlane.f32.xlu0 %v1038
        %v1040 = vpop.xlane.xlu0 %1039
        %vm1041 = vcmp.eq.f32.partialorder %v1038, %v1040
        %v1042 = vsel %vm1041, %v1037, inf
        %1043 = vmin.xlane.f32.xlu0 %v1042
        %v1044 = vpop.xlane.xlu0 %1043
        %v1045 = vcvt.f32.s32 %v1044
        %v1046 = vcvt.f32.s32 %v1040
        %v1047 = vshll.u32 %v1046, 16
        %v1048 = vadd.s32 %v1047, %v1045
        %vm1049 = vcmp.lt.s32.totalorder %v989, %v990
        %v1050 = vsel %vm1049, %v989, %v990
        %v1051 = vand.u32 %v1050, 65535
        %v1052 = vshra.s32 %v1050, 16
        %v1053 = vcvt.s32.f32 %v1051
        %v1054 = vcvt.s32.f32 %v1052
        %1055 = vmin.xlane.f32.xlu0 %v1054
        %v1056 = vpop.xlane.xlu0 %1055
        %vm1057 = vcmp.eq.f32.partialorder %v1054, %v1056
        %v1058 = vsel %vm1057, %v1053, inf
        %1059 = vmin.xlane.f32.xlu0 %v1058
        %v1060 = vpop.xlane.xlu0 %1059
        %v1061 = vcvt.f32.s32 %v1060
        %v1062 = vcvt.f32.s32 %v1056
        %v1063 = vshll.u32 %v1062, 16
        %v1064 = vadd.s32 %v1063, %v1061
        %vm1065 = vcmp.lt.s32.totalorder %v991, %v992
        %v1066 = vsel %vm1065, %v991, %v992
        %v1067 = vand.u32 %v1066, 65535
        %v1068 = vshra.s32 %v1066, 16
        %v1069 = vcvt.s32.f32 %v1067
        %v1070 = vcvt.s32.f32 %v1068
        %1071 = vmin.xlane.f32.xlu0 %v1070
        %v1072 = vpop.xlane.xlu0 %1071
        %vm1073 = vcmp.eq.f32.partialorder %v1070, %v1072
        %v1074 = vsel %vm1073, %v1069, inf
        %1075 = vmin.xlane.f32.xlu0 %v1074
        %v1076 = vpop.xlane.xlu0 %1075
        %v1077 = vcvt.f32.s32 %v1076
        %v1078 = vcvt.f32.s32 %v1072
        %v1079 = vshll.u32 %v1078, 16
        %v1080 = vadd.s32 %v1079, %v1077
        %vm1081 = vcmp.lt.s32.totalorder %v993, %v994
        %v1082 = vsel %vm1081, %v993, %v994
        %v1083 = vand.u32 %v1082, 65535
        %v1084 = vshra.s32 %v1082, 16
        %v1085 = vcvt.s32.f32 %v1083
        %v1086 = vcvt.s32.f32 %v1084
        %1087 = vmin.xlane.f32.xlu0 %v1086
        %v1088 = vpop.xlane.xlu0 %1087
        %vm1089 = vcmp.eq.f32.partialorder %v1086, %v1088
        %v1090 = vsel %vm1089, %v1085, inf
        %1091 = vmin.xlane.f32.xlu0 %v1090
        %v1092 = vpop.xlane.xlu0 %1091
        %v1093 = vcvt.f32.s32 %v1092
        %v1094 = vcvt.f32.s32 %v1088
        %v1095 = vshll.u32 %v1094, 16
        %v1096 = vadd.s32 %v1095, %v1093
        %vm1097 = vcmp.lt.s32.totalorder %v995, %v996
        %v1098 = vsel %vm1097, %v995, %v996
        %v1099 = vand.u32 %v1098, 65535
        %v1100 = vshra.s32 %v1098, 16
        %v1101 = vcvt.s32.f32 %v1099
        %v1102 = vcvt.s32.f32 %v1100
        %1103 = vmin.xlane.f32.xlu0 %v1102
        %v1104 = vpop.xlane.xlu0 %1103
        %vm1105 = vcmp.eq.f32.partialorder %v1102, %v1104
        %v1106 = vsel %vm1105, %v1101, inf
        %1107 = vmin.xlane.f32.xlu0 %v1106
        %v1108 = vpop.xlane.xlu0 %1107
        %v1109 = vcvt.f32.s32 %v1108
        %v1110 = vcvt.f32.s32 %v1104
        %v1111 = vshll.u32 %v1110, 16
        %v1112 = vadd.s32 %v1111, %v1109
        %vm1113 = vcmp.lt.s32.totalorder %v997, %v998
        %v1114 = vsel %vm1113, %v997, %v998
        %v1115 = vand.u32 %v1114, 65535
        %v1116 = vshra.s32 %v1114, 16
        %v1117 = vcvt.s32.f32 %v1115
        %v1118 = vcvt.s32.f32 %v1116
        %1119 = vmin.xlane.f32.xlu0 %v1118
        %v1120 = vpop.xlane.xlu0 %1119
        %vm1121 = vcmp.eq.f32.partialorder %v1118, %v1120
        %v1122 = vsel %vm1121, %v1117, inf
        %1123 = vmin.xlane.f32.xlu0 %v1122
        %v1124 = vpop.xlane.xlu0 %1123
        %v1125 = vcvt.f32.s32 %v1124
        %v1126 = vcvt.f32.s32 %v1120
        %v1127 = vshll.u32 %v1126, 16
        %v1128 = vadd.s32 %v1127, %v1125
        %vm1129 = vcmp.lt.s32.totalorder %v999, %v1000
        %v1130 = vsel %vm1129, %v999, %v1000
        %v1131 = vand.u32 %v1130, 65535
        %v1132 = vshra.s32 %v1130, 16
        %v1133 = vcvt.s32.f32 %v1131
        %v1134 = vcvt.s32.f32 %v1132
        %1135 = vmin.xlane.f32.xlu0 %v1134
        %v1136 = vpop.xlane.xlu0 %1135
        %vm1137 = vcmp.eq.f32.partialorder %v1134, %v1136
        %v1138 = vsel %vm1137, %v1133, inf
        %1139 = vmin.xlane.f32.xlu0 %v1138
        %v1140 = vpop.xlane.xlu0 %1139
        %v1141 = vcvt.f32.s32 %v1140
        %v1142 = vcvt.f32.s32 %v1136
        %v1143 = vshll.u32 %v1142, 16
        %v1144 = vadd.s32 %v1143, %v1141
        %vm1145 = vcmp.lt.s32.totalorder %v1001, %v1002
        %v1146 = vsel %vm1145, %v1001, %v1002
        %v1147 = vand.u32 %v1146, 65535
        %v1148 = vshra.s32 %v1146, 16
        %v1149 = vcvt.s32.f32 %v1147
        %v1150 = vcvt.s32.f32 %v1148
        %1151 = vmin.xlane.f32.xlu0 %v1150
        %v1152 = vpop.xlane.xlu0 %1151
        %vm1153 = vcmp.eq.f32.partialorder %v1150, %v1152
        %v1154 = vsel %vm1153, %v1149, inf
        %1155 = vmin.xlane.f32.xlu0 %v1154
        %v1156 = vpop.xlane.xlu0 %1155
        %v1157 = vcvt.f32.s32 %v1156
        %v1158 = vcvt.f32.s32 %v1152
        %v1159 = vshll.u32 %v1158, 16
        %v1160 = vadd.s32 %v1159, %v1157
        %vm1161 = vcmp.lt.s32.totalorder %v1003, %v1004
        %v1162 = vsel %vm1161, %v1003, %v1004
        %v1163 = vand.u32 %v1162, 65535
        %v1164 = vshra.s32 %v1162, 16
        %v1165 = vcvt.s32.f32 %v1163
        %v1166 = vcvt.s32.f32 %v1164
        %1167 = vmin.xlane.f32.xlu0 %v1166
        %v1168 = vpop.xlane.xlu0 %1167
        %vm1169 = vcmp.eq.f32.partialorder %v1166, %v1168
        %v1170 = vsel %vm1169, %v1165, inf
        %1171 = vmin.xlane.f32.xlu0 %v1170
        %v1172 = vpop.xlane.xlu0 %1171
        %v1173 = vcvt.f32.s32 %v1172
        %v1174 = vcvt.f32.s32 %v1168
        %v1175 = vshll.u32 %v1174, 16
        %v1176 = vadd.s32 %v1175, %v1173
        %vm1177 = vcmp.lt.s32.totalorder %v1005, %v1006
        %v1178 = vsel %vm1177, %v1005, %v1006
        %v1179 = vand.u32 %v1178, 65535
        %v1180 = vshra.s32 %v1178, 16
        %v1181 = vcvt.s32.f32 %v1179
        %v1182 = vcvt.s32.f32 %v1180
        %1183 = vmin.xlane.f32.xlu0 %v1182
        %v1184 = vpop.xlane.xlu0 %1183
        %vm1185 = vcmp.eq.f32.partialorder %v1182, %v1184
        %v1186 = vsel %vm1185, %v1181, inf
        %1187 = vmin.xlane.f32.xlu0 %v1186
        %v1188 = vpop.xlane.xlu0 %1187
        %v1189 = vcvt.f32.s32 %v1188
        %v1190 = vcvt.f32.s32 %v1184
        %v1191 = vshll.u32 %v1190, 16
        %v1192 = vadd.s32 %v1191, %v1189
        %vm1193 = vcmp.lt.s32.totalorder %v1007, %v1008
        %v1194 = vsel %vm1193, %v1007, %v1008
        %v1195 = vand.u32 %v1194, 65535
        %v1196 = vshra.s32 %v1194, 16
        %v1197 = vcvt.s32.f32 %v1195
        %v1198 = vcvt.s32.f32 %v1196
        %1199 = vmin.xlane.f32.xlu0 %v1198
        %v1200 = vpop.xlane.xlu0 %1199
        %vm1201 = vcmp.eq.f32.partialorder %v1198, %v1200
        %v1202 = vsel %vm1201, %v1197, inf
        %1203 = vmin.xlane.f32.xlu0 %v1202
        %v1204 = vpop.xlane.xlu0 %1203
        %v1205 = vcvt.f32.s32 %v1204
        %v1206 = vcvt.f32.s32 %v1200
        %v1207 = vshll.u32 %v1206, 16
        %v1208 = vadd.s32 %v1207, %v1205
        %vm1209 = vcmp.lt.s32.totalorder %v1009, %v1010
        %v1210 = vsel %vm1209, %v1009, %v1010
        %v1211 = vand.u32 %v1210, 65535
        %v1212 = vshra.s32 %v1210, 16
        %v1213 = vcvt.s32.f32 %v1211
        %v1214 = vcvt.s32.f32 %v1212
        %1215 = vmin.xlane.f32.xlu0 %v1214
        %v1216 = vpop.xlane.xlu0 %1215
        %vm1217 = vcmp.eq.f32.partialorder %v1214, %v1216
        %v1218 = vsel %vm1217, %v1213, inf
        %1219 = vmin.xlane.f32.xlu0 %v1218
        %v1220 = vpop.xlane.xlu0 %1219
        %v1221 = vcvt.f32.s32 %v1220
        %v1222 = vcvt.f32.s32 %v1216
        %v1223 = vshll.u32 %v1222, 16
        %v1224 = vadd.s32 %v1223, %v1221
        %vm1225 = vcmp.lt.s32.totalorder %v1011, %v1012
        %v1226 = vsel %vm1225, %v1011, %v1012
        %v1227 = vand.u32 %v1226, 65535
        %v1228 = vshra.s32 %v1226, 16
        %v1229 = vcvt.s32.f32 %v1227
        %v1230 = vcvt.s32.f32 %v1228
        %1231 = vmin.xlane.f32.xlu0 %v1230
        %v1232 = vpop.xlane.xlu0 %1231
        %vm1233 = vcmp.eq.f32.partialorder %v1230, %v1232
        %v1234 = vsel %vm1233, %v1229, inf
        %1235 = vmin.xlane.f32.xlu0 %v1234
        %v1236 = vpop.xlane.xlu0 %1235
        %v1237 = vcvt.f32.s32 %v1236
        %v1238 = vcvt.f32.s32 %v1232
        %v1239 = vshll.u32 %v1238, 16
        %v1240 = vadd.s32 %v1239, %v1237
        %vm1241 = vcmp.lt.s32.totalorder %v1013, %v1014
        %v1242 = vsel %vm1241, %v1013, %v1014
        %v1243 = vand.u32 %v1242, 65535
        %v1244 = vshra.s32 %v1242, 16
        %v1245 = vcvt.s32.f32 %v1243
        %v1246 = vcvt.s32.f32 %v1244
        %1247 = vmin.xlane.f32.xlu0 %v1246
        %v1248 = vpop.xlane.xlu0 %1247
        %vm1249 = vcmp.eq.f32.partialorder %v1246, %v1248
        %v1250 = vsel %vm1249, %v1245, inf
        %1251 = vmin.xlane.f32.xlu0 %v1250
        %v1252 = vpop.xlane.xlu0 %1251
        %v1253 = vcvt.f32.s32 %v1252
        %v1254 = vcvt.f32.s32 %v1248
        %v1255 = vshll.u32 %v1254, 16
        %v1256 = vadd.s32 %v1255, %v1253
        %vm1257 = vcmp.lt.s32.totalorder %v1015, %v1016
        %v1258 = vsel %vm1257, %v1015, %v1016
        %v1259 = vand.u32 %v1258, 65535
        %v1260 = vshra.s32 %v1258, 16
        %v1261 = vcvt.s32.f32 %v1259
        %v1262 = vcvt.s32.f32 %v1260
        %1263 = vmin.xlane.f32.xlu0 %v1262
        %v1264 = vpop.xlane.xlu0 %1263
        %vm1265 = vcmp.eq.f32.partialorder %v1262, %v1264
        %v1266 = vsel %vm1265, %v1261, inf
        %1267 = vmin.xlane.f32.xlu0 %v1266
        %v1268 = vpop.xlane.xlu0 %1267
        %v1269 = vcvt.f32.s32 %v1268
        %v1270 = vcvt.f32.s32 %v1264
        %v1271 = vshll.u32 %v1270, 16
        %v1272 = vadd.s32 %v1271, %v1269
        %1273 = vst.msk [vmem:[%s409] sm:$0xff] %vm888, %v1032
        %1274 = vst.msk [vmem:[%s409 + $0x8] sm:$0xff] %vm888, %v1048
        %1275 = vst.msk [vmem:[%s409 + $0x10] sm:$0xff] %vm888, %v1064
        %1276 = vst.msk [vmem:[%s409 + $0x18] sm:$0xff] %vm888, %v1080
        %1277 = vst.msk [vmem:[%s409 + $0x20] sm:$0xff] %vm888, %v1096
        %1278 = vst.msk [vmem:[%s409 + $0x28] sm:$0xff] %vm888, %v1112
        %1279 = vst.msk [vmem:[%s409 + $0x30] sm:$0xff] %vm888, %v1128
        %1280 = vst.msk [vmem:[%s409 + $0x38] sm:$0xff] %vm888, %v1144
        %1281 = vst.msk [vmem:[%s409 + $0x40] sm:$0xff] %vm888, %v1160
        %1282 = vst.msk [vmem:[%s409 + $0x48] sm:$0xff] %vm888, %v1176
        %1283 = vst.msk [vmem:[%s409 + $0x50] sm:$0xff] %vm888, %v1192
        %1284 = vst.msk [vmem:[%s409 + $0x58] sm:$0xff] %vm888, %v1208
        %1285 = vst.msk [vmem:[%s409 + $0x60] sm:$0xff] %vm888, %v1224
        %1286 = vst.msk [vmem:[%s409 + $0x68] sm:$0xff] %vm888, %v1240
        %1287 = vst.msk [vmem:[%s409 + $0x70] sm:$0xff] %vm888, %v1256
        %1288 = vst.msk [vmem:[%s409 + $0x78] sm:$0xff] %vm888, %v1272
        %v1289 = vmax.f32 %v661, %v665
        %v1290 = vmax.f32 %v663, %v667
        %v1291 = vmax.f32 %v1289, %v669
        %v1292 = vmax.f32 %v1290, %v671
        %v1293 = vmax.f32 %v1291, %v673
        %v1294 = vmax.f32 %v1292, %v675
        %v1295 = vmax.f32 %v1293, %v677
        %v1296 = vmax.f32 %v1294, %v679
        %v1297 = vmax.f32 %v1295, %v681
        %v1298 = vmax.f32 %v1296, %v683
        %v1299 = vmax.f32 %v1297, %v685
        %v1300 = vmax.f32 %v1298, %v687
        %v1301 = vmax.f32 %v1299, %v689
        %v1302 = vmax.f32 %v1300, %v691
        %v1303 = vmax.f32 %v1301, %v1302
        %v1304 = vrot.slane %v1303, 4
        %v1305 = vmax.f32 %v1303, %v1304
        %v1306 = vrot.slane %v1305, 2
        %v1307 = vmax.f32 %v1305, %v1306
        %v1308 = vrot.slane %v1307, 1
        %v1309 = vmax.f32 %v1307, %v1308
        %v1310 = vmax.f32 %v662, %v666
        %v1311 = vmax.f32 %v664, %v668
        %v1312 = vmax.f32 %v1310, %v670
        %v1313 = vmax.f32 %v1311, %v672
        %v1314 = vmax.f32 %v1312, %v674
        %v1315 = vmax.f32 %v1313, %v676
        %v1316 = vmax.f32 %v1314, %v678
        %v1317 = vmax.f32 %v1315, %v680
        %v1318 = vmax.f32 %v1316, %v682
        %v1319 = vmax.f32 %v1317, %v684
        %v1320 = vmax.f32 %v1318, %v686
        %v1321 = vmax.f32 %v1319, %v688
        %v1322 = vmax.f32 %v1320, %v690
        %v1323 = vmax.f32 %v1321, %v692
        %v1324 = vmax.f32 %v1322, %v1323
        %v1325 = vrot.slane %v1324, 4
        %v1326 = vmax.f32 %v1324, %v1325
        %v1327 = vrot.slane %v1326, 2
        %v1328 = vmax.f32 %v1326, %v1327
        %v1329 = vrot.slane %v1328, 1
        %v1330 = vmax.f32 %v1328, %v1329
        %v1331 = vsub.f32 %v661, %v1309
        %v1332 = vsub.f32 %v662, %v1330
        %v1333 = vsub.f32 %v663, %v1309
        %v1334 = vsub.f32 %v664, %v1330
        %v1335 = vsub.f32 %v665, %v1309
        %v1336 = vsub.f32 %v666, %v1330
        %v1337 = vsub.f32 %v667, %v1309
        %v1338 = vsub.f32 %v668, %v1330
        %v1339 = vsub.f32 %v669, %v1309
        %v1340 = vsub.f32 %v670, %v1330
        %v1341 = vsub.f32 %v671, %v1309
        %v1342 = vsub.f32 %v672, %v1330
        %v1343 = vsub.f32 %v673, %v1309
        %v1344 = vsub.f32 %v674, %v1330
        %v1345 = vsub.f32 %v675, %v1309
        %v1346 = vsub.f32 %v676, %v1330
        %v1347 = vsub.f32 %v677, %v1309
        %v1348 = vsub.f32 %v678, %v1330
        %v1349 = vsub.f32 %v679, %v1309
        %v1350 = vsub.f32 %v680, %v1330
        %v1351 = vsub.f32 %v681, %v1309
        %v1352 = vsub.f32 %v682, %v1330
        %v1353 = vsub.f32 %v683, %v1309
        %v1354 = vsub.f32 %v684, %v1330
        %v1355 = vsub.f32 %v685, %v1309
        %v1356 = vsub.f32 %v686, %v1330
        %v1357 = vsub.f32 %v687, %v1309
        %v1358 = vsub.f32 %v688, %v1330
        %v1359 = vsub.f32 %v689, %v1309
        %v1360 = vsub.f32 %v690, %v1330
        %v1361 = vsub.f32 %v691, %v1309
        %v1362 = vsub.f32 %v692, %v1330
        %v1363 = vmul.f32 %v1331, 1.442695
        %v1364 = vpow.pop %v1363
        %v1365 = vmul.f32 %v1332, 1.442695
        %v1366 = vpow.pop %v1365
        %v1367 = vmul.f32 %v1333, 1.442695
        %v1368 = vpow.pop %v1367
        %v1369 = vmul.f32 %v1334, 1.442695
        %v1370 = vpow.pop %v1369
        %v1371 = vmul.f32 %v1335, 1.442695
        %v1372 = vpow.pop %v1371
        %v1373 = vmul.f32 %v1336, 1.442695
        %v1374 = vpow.pop %v1373
        %v1375 = vmul.f32 %v1337, 1.442695
        %v1376 = vpow.pop %v1375
        %v1377 = vmul.f32 %v1338, 1.442695
        %v1378 = vpow.pop %v1377
        %v1379 = vmul.f32 %v1339, 1.442695
        %v1380 = vpow.pop %v1379
        %v1381 = vmul.f32 %v1340, 1.442695
        %v1382 = vpow.pop %v1381
        %v1383 = vmul.f32 %v1341, 1.442695
        %v1384 = vpow.pop %v1383
        %v1385 = vmul.f32 %v1342, 1.442695
        %v1386 = vpow.pop %v1385
        %v1387 = vmul.f32 %v1343, 1.442695
        %v1388 = vpow.pop %v1387
        %v1389 = vmul.f32 %v1344, 1.442695
        %v1390 = vpow.pop %v1389
        %v1391 = vmul.f32 %v1345, 1.442695
        %v1392 = vpow.pop %v1391
        %v1393 = vmul.f32 %v1346, 1.442695
        %v1394 = vpow.pop %v1393
        %v1395 = vmul.f32 %v1347, 1.442695
        %v1396 = vpow.pop %v1395
        %v1397 = vmul.f32 %v1348, 1.442695
        %v1398 = vpow.pop %v1397
        %v1399 = vmul.f32 %v1349, 1.442695
        %v1400 = vpow.pop %v1399
        %v1401 = vmul.f32 %v1350, 1.442695
        %v1402 = vpow.pop %v1401
        %v1403 = vmul.f32 %v1351, 1.442695
        %v1404 = vpow.pop %v1403
        %v1405 = vmul.f32 %v1352, 1.442695
        %v1406 = vpow.pop %v1405
        %v1407 = vmul.f32 %v1353, 1.442695
        %v1408 = vpow.pop %v1407
        %v1409 = vmul.f32 %v1354, 1.442695
        %v1410 = vpow.pop %v1409
        %v1411 = vmul.f32 %v1355, 1.442695
        %v1412 = vpow.pop %v1411
        %v1413 = vmul.f32 %v1356, 1.442695
        %v1414 = vpow.pop %v1413
        %v1415 = vmul.f32 %v1357, 1.442695
        %v1416 = vpow.pop %v1415
        %v1417 = vmul.f32 %v1358, 1.442695
        %v1418 = vpow.pop %v1417
        %v1419 = vmul.f32 %v1359, 1.442695
        %v1420 = vpow.pop %v1419
        %v1421 = vmul.f32 %v1360, 1.442695
        %v1422 = vpow.pop %v1421
        %v1423 = vmul.f32 %v1361, 1.442695
        %v1424 = vpow.pop %v1423
        %v1425 = vmul.f32 %v1362, 1.442695
        %v1426 = vpow.pop %v1425
        %v1427 = vadd.f32 %v1364, %v1368
        %v1428 = vadd.f32 %v1427, %v1372
        %v1429 = vadd.f32 %v1428, %v1376
        %v1430 = vadd.f32 %v1429, %v1380
        %v1431 = vadd.f32 %v1430, %v1384
        %v1432 = vadd.f32 %v1431, %v1388
        %v1433 = vadd.f32 %v1432, %v1392
        %v1434 = vadd.f32 %v1433, %v1396
        %v1435 = vadd.f32 %v1434, %v1400
        %v1436 = vadd.f32 %v1435, %v1404
        %v1437 = vadd.f32 %v1436, %v1408
        %v1438 = vadd.f32 %v1437, %v1412
        %v1439 = vadd.f32 %v1438, %v1416
        %v1440 = vadd.f32 %v1439, %v1420
        %v1441 = vadd.f32 %v1440, %v1424
        %v1442 = vrot.slane %v1441, 4
        %v1443 = vadd.f32 %v1441, %v1442
        %v1444 = vrot.slane %v1443, 2
        %v1445 = vadd.f32 %v1443, %v1444
        %v1446 = vrot.slane %v1445, 1
        %v1447 = vadd.f32 %v1445, %v1446
        %v1448 = vadd.f32 %v1366, %v1370
        %v1449 = vadd.f32 %v1448, %v1374
        %v1450 = vadd.f32 %v1449, %v1378
        %v1451 = vadd.f32 %v1450, %v1382
        %v1452 = vadd.f32 %v1451, %v1386
        %v1453 = vadd.f32 %v1452, %v1390
        %v1454 = vadd.f32 %v1453, %v1394
        %v1455 = vadd.f32 %v1454, %v1398
        %v1456 = vadd.f32 %v1455, %v1402
        %v1457 = vadd.f32 %v1456, %v1406
        %v1458 = vadd.f32 %v1457, %v1410
        %v1459 = vadd.f32 %v1458, %v1414
        %v1460 = vadd.f32 %v1459, %v1418
        %v1461 = vadd.f32 %v1460, %v1422
        %v1462 = vadd.f32 %v1461, %v1426
        %v1463 = vrot.slane %v1462, 4
        %v1464 = vadd.f32 %v1462, %v1463
        %v1465 = vrot.slane %v1464, 2
        %v1466 = vadd.f32 %v1464, %v1465
        %v1467 = vrot.slane %v1466, 1
        %v1468 = vadd.f32 %v1466, %v1467
        %v1469 = vlaneseq
        %v1470 = vshrl.u32 %v1469, 7
        %v1471 = vadd.s32 %v1470, 8
        %v1472 = vadd.s32 %v1470, 16
        %v1473 = vadd.s32 %v1470, 24
        %v1474 = vadd.s32 %v1470, 32
        %v1475 = vadd.s32 %v1470, 40
        %v1476 = vadd.s32 %v1470, 48
        %v1477 = vadd.s32 %v1470, 56
        %v1478 = vadd.s32 %v1470, 64
        %v1479 = vadd.s32 %v1470, 72
        %v1480 = vadd.s32 %v1470, 80
        %v1481 = vadd.s32 %v1470, 88
        %v1482 = vadd.s32 %v1470, 96
        %v1483 = vadd.s32 %v1470, 104
        %v1484 = vadd.s32 %v1470, 112
        %v1485 = vadd.s32 %v1470, 120
        %vm1486 = vcmp.eq.f32.partialorder %v661, %v1309
        %vm1487 = vcmp.eq.f32.partialorder %v662, %v1330
        %vm1488 = vcmp.eq.f32.partialorder %v663, %v1309
        %vm1489 = vcmp.eq.f32.partialorder %v664, %v1330
        %vm1490 = vcmp.eq.f32.partialorder %v665, %v1309
        %vm1491 = vcmp.eq.f32.partialorder %v666, %v1330
        %vm1492 = vcmp.eq.f32.partialorder %v667, %v1309
        %vm1493 = vcmp.eq.f32.partialorder %v668, %v1330
        %vm1494 = vcmp.eq.f32.partialorder %v669, %v1309
        %vm1495 = vcmp.eq.f32.partialorder %v670, %v1330
        %vm1496 = vcmp.eq.f32.partialorder %v671, %v1309
        %vm1497 = vcmp.eq.f32.partialorder %v672, %v1330
        %vm1498 = vcmp.eq.f32.partialorder %v673, %v1309
        %vm1499 = vcmp.eq.f32.partialorder %v674, %v1330
        %vm1500 = vcmp.eq.f32.partialorder %v675, %v1309
        %vm1501 = vcmp.eq.f32.partialorder %v676, %v1330
        %vm1502 = vcmp.eq.f32.partialorder %v677, %v1309
        %vm1503 = vcmp.eq.f32.partialorder %v678, %v1330
        %vm1504 = vcmp.eq.f32.partialorder %v679, %v1309
        %vm1505 = vcmp.eq.f32.partialorder %v680, %v1330
        %vm1506 = vcmp.eq.f32.partialorder %v681, %v1309
        %vm1507 = vcmp.eq.f32.partialorder %v682, %v1330
        %vm1508 = vcmp.eq.f32.partialorder %v683, %v1309
        %vm1509 = vcmp.eq.f32.partialorder %v684, %v1330
        %vm1510 = vcmp.eq.f32.partialorder %v685, %v1309
        %vm1511 = vcmp.eq.f32.partialorder %v686, %v1330
        %vm1512 = vcmp.eq.f32.partialorder %v687, %v1309
        %vm1513 = vcmp.eq.f32.partialorder %v688, %v1330
        %vm1514 = vcmp.eq.f32.partialorder %v689, %v1309
        %vm1515 = vcmp.eq.f32.partialorder %v690, %v1330
        %vm1516 = vcmp.eq.f32.partialorder %v691, %v1309
        %vm1517 = vcmp.eq.f32.partialorder %v692, %v1330
        %v1518 = vsel %vm1486, %v1470, 128
        %v1519 = vsel %vm1487, %v1470, 128
        %v1520 = vsel %vm1488, %v1471, 128
        %v1521 = vsel %vm1489, %v1471, 128
        %v1522 = vsel %vm1490, %v1472, 128
        %v1523 = vsel %vm1491, %v1472, 128
        %v1524 = vsel %vm1492, %v1473, 128
        %v1525 = vsel %vm1493, %v1473, 128
        %v1526 = vsel %vm1494, %v1474, 128
        %v1527 = vsel %vm1495, %v1474, 128
        %v1528 = vsel %vm1496, %v1475, 128
        %v1529 = vsel %vm1497, %v1475, 128
        %v1530 = vsel %vm1498, %v1476, 128
        %v1531 = vsel %vm1499, %v1476, 128
        %v1532 = vsel %vm1500, %v1477, 128
        %v1533 = vsel %vm1501, %v1477, 128
        %v1534 = vsel %vm1502, %v1478, 128
        %v1535 = vsel %vm1503, %v1478, 128
        %v1536 = vsel %vm1504, %v1479, 128
        %v1537 = vsel %vm1505, %v1479, 128
        %v1538 = vsel %vm1506, %v1480, 128
        %v1539 = vsel %vm1507, %v1480, 128
        %v1540 = vsel %vm1508, %v1481, 128
        %v1541 = vsel %vm1509, %v1481, 128
        %v1542 = vsel %vm1510, %v1482, 128
        %v1543 = vsel %vm1511, %v1482, 128
        %v1544 = vsel %vm1512, %v1483, 128
        %v1545 = vsel %vm1513, %v1483, 128
        %v1546 = vsel %vm1514, %v1484, 128
        %v1547 = vsel %vm1515, %v1484, 128
        %v1548 = vsel %vm1516, %v1485, 128
        %v1549 = vsel %vm1517, %v1485, 128
        %vm1550 = vcmp.lt.s32.totalorder %v1518, %v1522
        %v1551 = vsel %vm1550, %v1518, %v1522
        %vm1552 = vcmp.lt.s32.totalorder %v1520, %v1524
        %v1553 = vsel %vm1552, %v1520, %v1524
        %vm1554 = vcmp.lt.s32.totalorder %v1551, %v1526
        %v1555 = vsel %vm1554, %v1551, %v1526
        %vm1556 = vcmp.lt.s32.totalorder %v1553, %v1528
        %v1557 = vsel %vm1556, %v1553, %v1528
        %vm1558 = vcmp.lt.s32.totalorder %v1555, %v1530
        %v1559 = vsel %vm1558, %v1555, %v1530
        %vm1560 = vcmp.lt.s32.totalorder %v1557, %v1532
        %v1561 = vsel %vm1560, %v1557, %v1532
        %vm1562 = vcmp.lt.s32.totalorder %v1559, %v1534
        %v1563 = vsel %vm1562, %v1559, %v1534
        %vm1564 = vcmp.lt.s32.totalorder %v1561, %v1536
        %v1565 = vsel %vm1564, %v1561, %v1536
        %vm1566 = vcmp.lt.s32.totalorder %v1563, %v1538
        %v1567 = vsel %vm1566, %v1563, %v1538
        %vm1568 = vcmp.lt.s32.totalorder %v1565, %v1540
        %v1569 = vsel %vm1568, %v1565, %v1540
        %vm1570 = vcmp.lt.s32.totalorder %v1567, %v1542
        %v1571 = vsel %vm1570, %v1567, %v1542
        %vm1572 = vcmp.lt.s32.totalorder %v1569, %v1544
        %v1573 = vsel %vm1572, %v1569, %v1544
        %vm1574 = vcmp.lt.s32.totalorder %v1571, %v1546
        %v1575 = vsel %vm1574, %v1571, %v1546
        %vm1576 = vcmp.lt.s32.totalorder %v1573, %v1548
        %v1577 = vsel %vm1576, %v1573, %v1548
        %vm1578 = vcmp.lt.s32.totalorder %v1575, %v1577
        %v1579 = vsel %vm1578, %v1575, %v1577
        %v1580 = vrot.slane %v1579, 4
        %vm1581 = vcmp.lt.s32.totalorder %v1579, %v1580
        %v1582 = vsel %vm1581, %v1579, %v1580
        %v1583 = vrot.slane %v1582, 2
        %vm1584 = vcmp.lt.s32.totalorder %v1582, %v1583
        %v1585 = vsel %vm1584, %v1582, %v1583
        %v1586 = vrot.slane %v1585, 1
        %vm1587 = vcmp.lt.s32.totalorder %v1585, %v1586
        %v1588 = vsel %vm1587, %v1585, %v1586
        %vm1589 = vcmp.lt.s32.totalorder %v1519, %v1523
        %v1590 = vsel %vm1589, %v1519, %v1523
        %vm1591 = vcmp.lt.s32.totalorder %v1521, %v1525
        %v1592 = vsel %vm1591, %v1521, %v1525
        %vm1593 = vcmp.lt.s32.totalorder %v1590, %v1527
        %v1594 = vsel %vm1593, %v1590, %v1527
        %vm1595 = vcmp.lt.s32.totalorder %v1592, %v1529
        %v1596 = vsel %vm1595, %v1592, %v1529
        %vm1597 = vcmp.lt.s32.totalorder %v1594, %v1531
        %v1598 = vsel %vm1597, %v1594, %v1531
        %vm1599 = vcmp.lt.s32.totalorder %v1596, %v1533
        %v1600 = vsel %vm1599, %v1596, %v1533
        %vm1601 = vcmp.lt.s32.totalorder %v1598, %v1535
        %v1602 = vsel %vm1601, %v1598, %v1535
        %vm1603 = vcmp.lt.s32.totalorder %v1600, %v1537
        %v1604 = vsel %vm1603, %v1600, %v1537
        %vm1605 = vcmp.lt.s32.totalorder %v1602, %v1539
        %v1606 = vsel %vm1605, %v1602, %v1539
        %vm1607 = vcmp.lt.s32.totalorder %v1604, %v1541
        %v1608 = vsel %vm1607, %v1604, %v1541
        %vm1609 = vcmp.lt.s32.totalorder %v1606, %v1543
        %v1610 = vsel %vm1609, %v1606, %v1543
        %vm1611 = vcmp.lt.s32.totalorder %v1608, %v1545
        %v1612 = vsel %vm1611, %v1608, %v1545
        %vm1613 = vcmp.lt.s32.totalorder %v1610, %v1547
        %v1614 = vsel %vm1613, %v1610, %v1547
        %vm1615 = vcmp.lt.s32.totalorder %v1612, %v1549
        %v1616 = vsel %vm1615, %v1612, %v1549
        %vm1617 = vcmp.lt.s32.totalorder %v1614, %v1616
        %v1618 = vsel %vm1617, %v1614, %v1616
        %v1619 = vrot.slane %v1618, 4
        %vm1620 = vcmp.lt.s32.totalorder %v1618, %v1619
        %v1621 = vsel %vm1620, %v1618, %v1619
        %v1622 = vrot.slane %v1621, 2
        %vm1623 = vcmp.lt.s32.totalorder %v1621, %v1622
        %v1624 = vsel %vm1623, %v1621, %v1622
        %v1625 = vrot.slane %v1624, 1
        %vm1626 = vcmp.lt.s32.totalorder %v1624, %v1625
        %v1627 = vsel %vm1626, %v1624, %v1625
        %s1628 = smul.u32 %s43, 128
        %v1629 = vstv %s1628
        %v1630 = vadd.s32 %v1588, %v1629
        %v1631 = vadd.s32 %v1627, %v1629
        %p1632 = scmp.eq.s32.totalorder %s43, 0
        // Predicated region
        $region37: #{tpu_custom_call.1} parent=27 // pred_check
          %p1633 = pneg %p1632
        $region38: #{tpu_custom_call.1} parent=27 // pred_check_branch
          %1635 = sbr.rel (%p1633) target = $region40
        $region39: #{tpu_custom_call.1} parent=27 // pred_region
          %v1638 = vcombine.low %v1309, %v1330
          %v1640 = vunpack.c.l.s4 1966171168
          %v1641 = vunpack.c.0.s8 %v1640
          %v1642 = vlaneseq
          %v1643 = vshrl.u32 %v1642, 7
          %v1644 = vsub.s32 %v1641, %v1643
          %v1645 = vrot.slane %v1638, %v1644
          %v1647 = vunpack.c.l.s4 1966171168
          %v1648 = vunpack.c.0.s8 %v1647
          %v1649 = vlaneseq
          %v1650 = vshrl.u32 %v1649, 7
          %v1651 = vsub.s32 %v1648, %v1650
          %v1652 = vrot.slane %v1645, %v1651
          %v1654 = vlaneseq
          %vm1655 = vcmp.ge.s32.totalorder %v1654, 0
          %vm1656 = vcmp.lt.s32.totalorder %v1654, 256
          %vm1657 = vmand %vm1655, %vm1656
          %1658 = vst.msk [vmem:[%s416] sm:$0x3] %vm1657, %v1652
          %v1661 = vcombine.low %v1447, %v1468
          %v1663 = vunpack.c.l.s4 1966171168
          %v1664 = vunpack.c.0.s8 %v1663
          %v1665 = vlaneseq
          %v1666 = vshrl.u32 %v1665, 7
          %v1667 = vsub.s32 %v1664, %v1666
          %v1668 = vrot.slane %v1661, %v1667
          %v1670 = vunpack.c.l.s4 1966171168
          %v1671 = vunpack.c.0.s8 %v1670
          %v1672 = vlaneseq
          %v1673 = vshrl.u32 %v1672, 7
          %v1674 = vsub.s32 %v1671, %v1673
          %v1675 = vrot.slane %v1668, %v1674
          %1677 = vst.msk [vmem:[%s423] sm:$0x3] %vm1657, %v1675
          %v1678 = vcombine.low %v1630, %v1631
          %v1680 = vunpack.c.l.s4 1966171168
          %v1681 = vunpack.c.0.s8 %v1680
          %v1682 = vlaneseq
          %v1683 = vshrl.u32 %v1682, 7
          %v1684 = vsub.s32 %v1681, %v1683
          %v1685 = vrot.slane %v1678, %v1684
          %v1687 = vunpack.c.l.s4 1966171168
          %v1688 = vunpack.c.0.s8 %v1687
          %v1689 = vlaneseq
          %v1690 = vshrl.u32 %v1689, 7
          %v1691 = vsub.s32 %v1688, %v1690
          %v1692 = vrot.slane %v1685, %v1691
          %1693 = vst.msk [vmem:[%s437] sm:$0x3] %vm1657, %v1692
        $region40: #{tpu_custom_call.1} parent=27 // pred_fallthru
          _
        %p1694 = scmp.gt.s32.totalorder %s43, 0
        // Predicated region
        $region41: #{tpu_custom_call.1} parent=27 // pred_check
          %p1695 = pneg %p1694
        $region42: #{tpu_custom_call.1} parent=27 // pred_check_branch
          %1697 = sbr.rel (%p1695) target = $region44
        $region43: #{tpu_custom_call.1} parent=27 // pred_region
          %v1698 = vld [vmem:[%s416] sm:$0x3]
          %v1701 = vcombine.low %v1309, %v1330
          %v1703 = vunpack.c.l.s4 1966171168
          %v1704 = vunpack.c.0.s8 %v1703
          %v1705 = vlaneseq
          %v1706 = vshrl.u32 %v1705, 7
          %v1707 = vsub.s32 %v1704, %v1706
          %v1708 = vrot.slane %v1701, %v1707
          %v1710 = vunpack.c.l.s4 1966171168
          %v1711 = vunpack.c.0.s8 %v1710
          %v1712 = vlaneseq
          %v1713 = vshrl.u32 %v1712, 7
          %v1714 = vsub.s32 %v1711, %v1713
          %v1715 = vrot.slane %v1708, %v1714
          %v1717 = vmax.f32 %v1698, %v1715
          %v1718 = vld [vmem:[%s423] sm:$0x3]
          %v1719 = vsub.f32 %v1698, %v1717
          %v1720 = vmul.f32 %v1719, 1.442695
          %v1721 = vpow.pop %v1720
          %v1722 = vmul.f32 %v1718, %v1721
          %v1724 = vlaneseq
          %v1725 = vshrl.u32 %v1724, 7
          %v1726 = vsub.s32 0, %v1725
          %v1727 = vrot.slane %v1717, %v1726
          %v1728 = vlaneseq
          %v1729 = vshrl.u32 %v1728, 7
          %v1730 = vsub.s32 1, %v1729
          %v1731 = vrot.slane %v1717, %v1730
          %v1734 = vsub.f32 %v1309, %v1727
          %v1735 = vsub.f32 %v1330, %v1731
          %v1736 = vmul.f32 %v1734, 1.442695
          %v1737 = vpow.pop %v1736
          %v1738 = vmul.f32 %v1735, 1.442695
          %v1739 = vpow.pop %v1738
          %v1740 = vmul.f32 %v1447, %v1737
          %v1741 = vmul.f32 %v1468, %v1739
          %v1744 = vcombine.low %v1740, %v1741
          %v1746 = vunpack.c.l.s4 1966171168
          %v1747 = vunpack.c.0.s8 %v1746
          %v1748 = vlaneseq
          %v1749 = vshrl.u32 %v1748, 7
          %v1750 = vsub.s32 %v1747, %v1749
          %v1751 = vrot.slane %v1744, %v1750
          %v1753 = vunpack.c.l.s4 1966171168
          %v1754 = vunpack.c.0.s8 %v1753
          %v1755 = vlaneseq
          %v1756 = vshrl.u32 %v1755, 7
          %v1757 = vsub.s32 %v1754, %v1756
          %v1758 = vrot.slane %v1751, %v1757
          %v1760 = vadd.f32 %v1722, %v1758
          %v1761 = vlaneseq
          %vm1762 = vcmp.ge.s32.totalorder %v1761, 0
          %vm1763 = vcmp.lt.s32.totalorder %v1761, 256
          %vm1764 = vmand %vm1762, %vm1763
          %1765 = vst.msk [vmem:[%s423] sm:$0x3] %vm1764, %v1760
          %v1767 = vlaneseq
          %v1768 = vshrl.u32 %v1767, 7
          %v1769 = vsub.s32 0, %v1768
          %v1770 = vrot.slane %v1698, %v1769
          %v1771 = vlaneseq
          %v1772 = vshrl.u32 %v1771, 7
          %v1773 = vsub.s32 1, %v1772
          %v1774 = vrot.slane %v1698, %v1773
          %vm1777 = vcmp.gt.f32.partialorder %v1309, %v1770
          %vm1778 = vcmp.gt.f32.partialorder %v1330, %v1774
          %v1779 = vld [vmem:[%s437] sm:$0x3]
          %v1780 = vlaneseq
          %v1781 = vshrl.u32 %v1780, 7
          %v1782 = vsub.s32 0, %v1781
          %v1783 = vrot.slane %v1779, %v1782
          %v1784 = vlaneseq
          %v1785 = vshrl.u32 %v1784, 7
          %v1786 = vsub.s32 1, %v1785
          %v1787 = vrot.slane %v1779, %v1786
          %v1788 = vsel %vm1777, %v1630, %v1783
          %v1789 = vsel %vm1778, %v1631, %v1787
          %v1790 = vcombine.low %v1788, %v1789
          %v1792 = vunpack.c.l.s4 1966171168
          %v1793 = vunpack.c.0.s8 %v1792
          %v1794 = vlaneseq
          %v1795 = vshrl.u32 %v1794, 7
          %v1796 = vsub.s32 %v1793, %v1795
          %v1797 = vrot.slane %v1790, %v1796
          %v1799 = vunpack.c.l.s4 1966171168
          %v1800 = vunpack.c.0.s8 %v1799
          %v1801 = vlaneseq
          %v1802 = vshrl.u32 %v1801, 7
          %v1803 = vsub.s32 %v1800, %v1802
          %v1804 = vrot.slane %v1797, %v1803
          %1805 = vst.msk [vmem:[%s437] sm:$0x3] %vm1764, %v1804
          %1806 = vst.msk [vmem:[%s416] sm:$0x3] %vm1764, %v1717
        $region44: #{tpu_custom_call.1} parent=27 // pred_fallthru
          _
        %p1807 = scmp.eq.s32.totalorder %s43, 1
        // Predicated region
        $region45: #{tpu_custom_call.1} parent=27 // pred_check
          %p1808 = pneg %p1807
        $region46: #{tpu_custom_call.1} parent=27 // pred_check_branch
          %1810 = sbr.rel (%p1808) target = $region48
        $region47: #{tpu_custom_call.1} parent=27 // pred_region
          %v1811 = vld [vmem:[%s423] sm:$0x3]
          %v1812 = vrcp.pop %v1811
          %v1813 = vmul.f32 1.0, %v1812
          %v1814 = vlaneseq
          %vm1815 = vcmp.ge.s32.totalorder %v1814, 0
          %vm1816 = vcmp.lt.s32.totalorder %v1814, 256
          %vm1817 = vmand %vm1815, %vm1816
          %1818 = vst.msk [vmem:[%s430] sm:$0x3] %vm1817, %v1813
        $region48: #{tpu_custom_call.1} parent=27 // pred_fallthru
          _
        %s1819 = sand.u32 %s114, 1
        %s1820 = scalar_lea.sflag [#allocation4], %s1819
        %s1821 = sand.u32 %s114, 1
        %s1822 = smul.addr %s1821, 128
        %s1823 = scalar_lea.vmem [#allocation7], %s1822
        %s1824 = sand.u32 %s38, 1
        %s1825 = scalar_lea.sflag [#allocation9], %s1824
        %s1826 = sand.u32 %s142, 1
        %s1827 = smul.addr %s1826, 128
        %s1828 = scalar_lea.vmem [#allocation8], %s1827
        %s1829 = sand.u32 %s38, 1
        %s1830 = scalar_lea.sflag [#allocation9], %s1829
        %s1831 = sand.u32 %s170, 1
        %s1832 = smul.addr %s1831, 128
        %s1833 = scalar_lea.vmem [#allocation10], %s1832
        %s1834 = sand.u32 %s38, 1
        %s1835 = scalar_lea.sflag [#allocation12], %s1834
        %s1836 = sand.u32 %s196, 1
        %s1837 = smul.addr %s1836, 2
        %s1838 = scalar_lea.vmem [#allocation11], %s1837
        %s1839 = sand.u32 %s38, 1
        %s1840 = scalar_lea.sflag [#allocation12], %s1839
        %s1841 = sand.u32 %s222, 1
        %s1842 = smul.addr %s1841, 2
        %s1843 = scalar_lea.vmem [#allocation13], %s1842
        %s1844 = sand.u32 %s38, 1
        %s1845 = scalar_lea.sflag [#allocation15], %s1844
        %s1846 = sand.u32 %s248, 1
        %s1847 = smul.addr %s1846, 2
        %s1848 = scalar_lea.vmem [#allocation14], %s1847
        %s1849 = sand.u32 %s38, 1
        %s1850 = scalar_lea.sflag [#allocation15], %s1849
        %s1851 = sand.u32 %s274, 1
        %s1852 = smul.addr %s1851, 2
        %s1853 = scalar_lea.vmem [#allocation16], %s1852
        // Predicated region
        $region49: #{tpu_custom_call.1} parent=27 // pred_check
          %p1854 = pneg %p124
        $region50: #{tpu_custom_call.1} parent=27 // pred_check_branch
          %1856 = sbr.rel (%p1854) target = $region52
        $region51: #{tpu_custom_call.1} parent=27 // pred_region
          %s1857 = smul.u32 16, %s43
          %s1859 = ssub.s32 2048, 2048
          %1860 = vsyncadd %s1820, %s1859
          %s1861 = smul.addr %s42, 32
          %s1862 = sadd.s32 %s1857, %s1861
          %s1863 = smul.addr %s1862, 128
          %s1864 = scalar_lea.hbm %s2, %s1863
          %s1865 = sshll.u32 %s1823, 4
          %s1866 = int_to_ptr.vmem [resolvable:$true] %s1865
          %1871 = dma.vmem_to_hbm [thread:$0]  %s1866, 2048, %s1864, %s1820, 128, 128, 8
        $region52: #{tpu_custom_call.1} parent=27 // pred_fallthru
          _
        // Predicated region
        $region53: #{tpu_custom_call.1} parent=27 // pred_check
          %p1872 = pneg %p152
        $region54: #{tpu_custom_call.1} parent=27 // pred_check_branch
          %1874 = sbr.rel (%p1872) target = $region56
        $region55: #{tpu_custom_call.1} parent=27 // pred_region
          %s1875 = smul.u32 16, %s43
          %s1877 = ssub.s32 2048, 2048
          %1878 = vsyncadd %s1825, %s1877
          %s1879 = smul.addr %s42, 32
          %s1880 = sadd.s32 %s1875, %s1879
          %s1881 = smul.addr %s1880, 128
          %s1882 = scalar_lea.hbm %s3, %s1881
          %s1883 = sshll.u32 %s1828, 4
          %s1884 = int_to_ptr.vmem [resolvable:$true] %s1883
          %1889 = dma.vmem_to_hbm [thread:$0]  %s1884, 2048, %s1882, %s1825, 128, 128, 8
        $region56: #{tpu_custom_call.1} parent=27 // pred_fallthru
          _
        // Predicated region
        $region57: #{tpu_custom_call.1} parent=27 // pred_check
          %p1890 = pneg %p180
        $region58: #{tpu_custom_call.1} parent=27 // pred_check_branch
          %1892 = sbr.rel (%p1890) target = $region60
        $region59: #{tpu_custom_call.1} parent=27 // pred_region
          %s1893 = smul.u32 16, %s43
          %s1895 = ssub.s32 2048, 2048
          %1896 = vsyncadd %s1830, %s1895
          %s1897 = smul.addr %s42, 32
          %s1898 = sadd.s32 %s1893, %s1897
          %s1899 = smul.addr %s1898, 128
          %s1900 = scalar_lea.hbm %s4, %s1899
          %s1901 = sshll.u32 %s1833, 4
          %s1902 = int_to_ptr.vmem [resolvable:$true] %s1901
          %1907 = dma.vmem_to_hbm [thread:$0]  %s1902, 2048, %s1900, %s1830, 128, 128, 8
        $region60: #{tpu_custom_call.1} parent=27 // pred_fallthru
          _
        // Predicated region
        $region61: #{tpu_custom_call.1} parent=27 // pred_check
          %p1908 = pneg %p206
        $region62: #{tpu_custom_call.1} parent=27 // pred_check_branch
          %1910 = sbr.rel (%p1908) target = $region64
        $region63: #{tpu_custom_call.1} parent=27 // pred_region
          %s1912 = ssub.s32 32, 32
          %1913 = vsyncadd %s1835, %s1912
          %s1914 = smul.addr %s42, 2
          %s1915 = smul.addr %s1914, 16
          %s1916 = scalar_lea.hbm %s5, %s1915
          %s1918 = sshll.u32 %s1838, 4
          %s1919 = int_to_ptr.vmem [resolvable:$true] %s1918
          %1921 = dma.vmem_to_hbm [thread:$0]  %s1919, 32, %s1916, %s1835
        $region64: #{tpu_custom_call.1} parent=27 // pred_fallthru
          _
        // Predicated region
        $region65: #{tpu_custom_call.1} parent=27 // pred_check
          %p1922 = pneg %p232
        $region66: #{tpu_custom_call.1} parent=27 // pred_check_branch
          %1924 = sbr.rel (%p1922) target = $region68
        $region67: #{tpu_custom_call.1} parent=27 // pred_region
          %s1926 = ssub.s32 32, 32
          %1927 = vsyncadd %s1840, %s1926
          %s1928 = smul.addr %s42, 2
          %s1929 = smul.addr %s1928, 16
          %s1930 = scalar_lea.hbm %s6, %s1929
          %s1932 = sshll.u32 %s1843, 4
          %s1933 = int_to_ptr.vmem [resolvable:$true] %s1932
          %1935 = dma.vmem_to_hbm [thread:$0]  %s1933, 32, %s1930, %s1840
        $region68: #{tpu_custom_call.1} parent=27 // pred_fallthru
          _
        // Predicated region
        $region69: #{tpu_custom_call.1} parent=27 // pred_check
          %p1936 = pneg %p258
        $region70: #{tpu_custom_call.1} parent=27 // pred_check_branch
          %1938 = sbr.rel (%p1936) target = $region72
        $region71: #{tpu_custom_call.1} parent=27 // pred_region
          %s1940 = ssub.s32 32, 32
          %1941 = vsyncadd %s1845, %s1940
          %s1942 = smul.addr %s42, 2
          %s1943 = smul.addr %s1942, 16
          %s1944 = scalar_lea.hbm %s7, %s1943
          %s1946 = sshll.u32 %s1848, 4
          %s1947 = int_to_ptr.vmem [resolvable:$true] %s1946
          %1949 = dma.vmem_to_hbm [thread:$0]  %s1947, 32, %s1944, %s1845
        $region72: #{tpu_custom_call.1} parent=27 // pred_fallthru
          _
        // Predicated region
        $region73: #{tpu_custom_call.1} parent=27 // pred_check
          %p1950 = pneg %p284
        $region74: #{tpu_custom_call.1} parent=27 // pred_check_branch
          %1952 = sbr.rel (%p1950) target = $region76
        $region75: #{tpu_custom_call.1} parent=27 // pred_region
          %s1954 = ssub.s32 32, 32
          %1955 = vsyncadd %s1850, %s1954
          %s1956 = smul.addr %s42, 2
          %s1957 = smul.addr %s1956, 16
          %s1958 = scalar_lea.hbm %s8, %s1957
          %s1960 = sshll.u32 %s1853, 4
          %s1961 = int_to_ptr.vmem [resolvable:$true] %s1960
          %1963 = dma.vmem_to_hbm [thread:$0]  %s1961, 32, %s1958, %s1850
        $region76: #{tpu_custom_call.1} parent=27 // pred_fallthru
          _
      $region28: #{tpu_custom_call.1} parent=5 // pred_fallthru
        _
      %p1964 = scmp.le.s32.totalorder 2, %s33
      // Predicated region
      $region77: #{tpu_custom_call.1} parent=5 // pred_check
        %p1965 = pneg %p1964
      $region78: #{tpu_custom_call.1} parent=5 // pred_check_branch
        %1967 = sbr.rel (%p1965) target = $region80
      $region79: #{tpu_custom_call.1} parent=5 // pred_region
        %s1968 = ssub.s32 %s33, 2
        // Predicated region
        $region81: #{tpu_custom_call.1} parent=79 // pred_check
          %p1969 = pneg %p130
        $region82: #{tpu_custom_call.1} parent=79 // pred_check_branch
          %1971 = sbr.rel (%p1969) target = $region84
        $region83: #{tpu_custom_call.1} parent=79 // pred_region
          %s1972 = sand.u32 %s115, 1
          %s1973 = scalar_lea.sflag [#allocation4], %s1972
          %s1974 = sand.u32 %s115, 1
          %s1975 = smul.addr %s1974, 128
          %s1976 = scalar_lea.vmem [#allocation7], %s1975
          %1977 = dma.done %s1973, 2048
        $region84: #{tpu_custom_call.1} parent=79 // pred_fallthru
          _
        // Predicated region
        $region85: #{tpu_custom_call.1} parent=79 // pred_check
          %p1978 = pneg %p158
        $region86: #{tpu_custom_call.1} parent=79 // pred_check_branch
          %1980 = sbr.rel (%p1978) target = $region88
        $region87: #{tpu_custom_call.1} parent=79 // pred_region
          %s1981 = sand.u32 %s39, 1
          %s1982 = scalar_lea.sflag [#allocation9], %s1981
          %s1983 = sand.u32 %s143, 1
          %s1984 = smul.addr %s1983, 128
          %s1985 = scalar_lea.vmem [#allocation8], %s1984
          %1986 = dma.done %s1982, 2048
        $region88: #{tpu_custom_call.1} parent=79 // pred_fallthru
          _
        // Predicated region
        $region89: #{tpu_custom_call.1} parent=79 // pred_check
          %p1987 = pneg %p186
        $region90: #{tpu_custom_call.1} parent=79 // pred_check_branch
          %1989 = sbr.rel (%p1987) target = $region92
        $region91: #{tpu_custom_call.1} parent=79 // pred_region
          %s1990 = sand.u32 %s39, 1
          %s1991 = scalar_lea.sflag [#allocation9], %s1990
          %s1992 = sand.u32 %s171, 1
          %s1993 = smul.addr %s1992, 128
          %s1994 = scalar_lea.vmem [#allocation10], %s1993
          %1995 = dma.done %s1991, 2048
        $region92: #{tpu_custom_call.1} parent=79 // pred_fallthru
          _
        // Predicated region
        $region93: #{tpu_custom_call.1} parent=79 // pred_check
          %p1996 = pneg %p212
        $region94: #{tpu_custom_call.1} parent=79 // pred_check_branch
          %1998 = sbr.rel (%p1996) target = $region96
        $region95: #{tpu_custom_call.1} parent=79 // pred_region
          %s1999 = sand.u32 %s39, 1
          %s2000 = scalar_lea.sflag [#allocation12], %s1999
          %s2001 = sand.u32 %s197, 1
          %s2002 = smul.addr %s2001, 2
          %s2003 = scalar_lea.vmem [#allocation11], %s2002
          %2004 = dma.done %s2000, 32
        $region96: #{tpu_custom_call.1} parent=79 // pred_fallthru
          _
        // Predicated region
        $region97: #{tpu_custom_call.1} parent=79 // pred_check
          %p2005 = pneg %p238
        $region98: #{tpu_custom_call.1} parent=79 // pred_check_branch
          %2007 = sbr.rel (%p2005) target = $region100
        $region99: #{tpu_custom_call.1} parent=79 // pred_region
          %s2008 = sand.u32 %s39, 1
          %s2009 = scalar_lea.sflag [#allocation12], %s2008
          %s2010 = sand.u32 %s223, 1
          %s2011 = smul.addr %s2010, 2
          %s2012 = scalar_lea.vmem [#allocation13], %s2011
          %2013 = dma.done %s2009, 32
        $region100: #{tpu_custom_call.1} parent=79 // pred_fallthru
          _
        // Predicated region
        $region101: #{tpu_custom_call.1} parent=79 // pred_check
          %p2014 = pneg %p264
        $region102: #{tpu_custom_call.1} parent=79 // pred_check_branch
          %2016 = sbr.rel (%p2014) target = $region104
        $region103: #{tpu_custom_call.1} parent=79 // pred_region
          %s2017 = sand.u32 %s39, 1
          %s2018 = scalar_lea.sflag [#allocation15], %s2017
          %s2019 = sand.u32 %s249, 1
          %s2020 = smul.addr %s2019, 2
          %s2021 = scalar_lea.vmem [#allocation14], %s2020
          %2022 = dma.done %s2018, 32
        $region104: #{tpu_custom_call.1} parent=79 // pred_fallthru
          _
        // Predicated region
        $region105: #{tpu_custom_call.1} parent=79 // pred_check
          %p2023 = pneg %p290
        $region106: #{tpu_custom_call.1} parent=79 // pred_check_branch
          %2025 = sbr.rel (%p2023) target = $region108
        $region107: #{tpu_custom_call.1} parent=79 // pred_region
          %s2026 = sand.u32 %s39, 1
          %s2027 = scalar_lea.sflag [#allocation15], %s2026
          %s2028 = sand.u32 %s275, 1
          %s2029 = smul.addr %s2028, 2
          %s2030 = scalar_lea.vmem [#allocation16], %s2029
          %2031 = dma.done %s2027, 32
        $region108: #{tpu_custom_call.1} parent=79 // pred_fallthru
          _
      $region80: #{tpu_custom_call.1} parent=5 // pred_fallthru
        _
    $region6: #{tpu_custom_call.1} parent=1 // loop_footer
      %s37 = sadd.s32 1, %s33
    $region7: #{tpu_custom_call.1} parent=1 // loop_footer_branch
      %32 = sbr.rel target = $region3
    $region8: #{tpu_custom_call.1} parent=1 // loop_exit
      _
    %2032 = vsyncpa [#allocation3], 1
    %s2033 = scalar_lea.sflag [#allocation3], 1
    %2034 = vsyncpa %s2033, 1
    %2035 = vsyncpa [#allocation6], 1
    %s2036 = scalar_lea.sflag [#allocation6], 1
    %2037 = vsyncpa %s2036, 1
    %2038 = vsyncpa [#allocation4], 1
    %s2039 = scalar_lea.sflag [#allocation4], 1
    %2040 = vsyncpa %s2039, 1
    %2041 = vsyncpa [#allocation9], 1
    %s2042 = scalar_lea.sflag [#allocation9], 1
    %2043 = vsyncpa %s2042, 1
    %2044 = vsyncpa [#allocation12], 1
    %s2045 = scalar_lea.sflag [#allocation12], 1
    %2046 = vsyncpa %s2045, 1
    %2047 = vsyncpa [#allocation15], 1
    %s2048 = scalar_lea.sflag [#allocation15], 1
    %2049 = vsyncpa %s2048, 1

</llo_original>
